<compile_context>
chip_gen: v5e
topology: v5e:2x2
jax: 0.10.0
libtpu: 0.0.40
codegen_flags: <defaults>
</compile_context>

<pallas_src>
import jax
import jax.numpy as jnp
from jax import lax
from jax.experimental import pallas as pl
from jax.experimental.pallas import tpu as pltpu

BLOCKSIZE = 64      # causal mask size (tril buffer in the PyTorch module)
N_EMBD = 384
HEAD_SIZE = 64


def _head_kernel(x_ref, wqkv_ref, bias_ref, o_ref, qkv_scr):
    # x_ref:    (Bb, T, C)   bf16 tile (Bb batch elements per grid step)
    # wqkv_ref: (C, 3H)      bf16 fused [q*scale | k | v] projection weights
    # bias_ref: (T, T)       f32 additive causal bias (0 on/below diag, -1e30 above)
    # o_ref:    (Bb, T, H)   f32 output tile
    # qkv_scr:  (Bb*T, 3H)   f32 VMEM scratch for the fused projection result
    Bb, T, C = x_ref.shape
    H = o_ref.shape[-1]

    # ---- fused QKV projection: one lane-dense MXU matmul, f32 accumulation --
    x2d = x_ref[...].reshape(Bb * T, C)                               # bf16
    qkv_scr[...] = jnp.dot(x2d, wqkv_ref[...],
                           preferred_element_type=jnp.float32)        # (Bb*T, 3H)

    # Slice q/k/v back out of VMEM (partial loads, no register relayout).
    # Scale (1/8) is already folded into the query weights.
    q = qkv_scr[:, 0 * H:1 * H].astype(jnp.bfloat16).reshape(Bb, T, H)
    k = qkv_scr[:, 1 * H:2 * H].astype(jnp.bfloat16).reshape(Bb, T, H)
    v = qkv_scr[:, 2 * H:3 * H].astype(jnp.bfloat16).reshape(Bb, T, H)

    # ---- scores: contract H of q and k directly (no explicit k.T) -----------
    s = jnp.einsum('bqd,bkd->bqk', q, k,
                   preferred_element_type=jnp.float32)                # (Bb, T, T)

    # causal mask as additive bias, broadcast over the batch dim
    s = s + bias_ref[...]

    # ---- softmax along last dim (f32; denom reciprocal on the EUP) ----------
    m = jnp.max(s, axis=-1, keepdims=True)
    e = jnp.exp(s - m)
    denom = jnp.sum(e, axis=-1, keepdims=True)
    p = (e * pl.reciprocal(denom, approx=True)).astype(jnp.bfloat16)

    # dropout: identity (eval mode)

    out = jnp.einsum('bqk,bkd->bqd', p, v,
                     preferred_element_type=jnp.float32)              # (Bb, T, H)
    o_ref[...] = out.astype(o_ref.dtype)


def head_forward(x, w_key, w_query, w_value, *, batch_block=None,
                 out_dtype=jnp.float32):
    """x: (B, T, C) f32.  w_*: (head_size, n_embd), as in nn.Linear.weight."""
    B, T, C = x.shape
    H = w_key.shape[0]

    # Fold the exact 1/sqrt(H) = 1/8 scale into the (tiny) query weights and
    # fuse the three projections into one (C, 3H) operand, order [q | k | v].
    scale = float(H) ** -0.5
    w_qkv = jnp.concatenate([w_query.T * scale, w_key.T, w_value.T], axis=1)

    # bf16 operands for the MXU; all dots accumulate in f32 inside the kernel.
    x_bf = x.astype(jnp.bfloat16)
    w_bf = w_qkv.astype(jnp.bfloat16)

    # Precomputed additive causal bias (0 keep / -1e30 mask), VMEM-resident.
    row = lax.broadcasted_iota(jnp.int32, (T, T), 0)
    col = lax.broadcasted_iota(jnp.int32, (T, T), 1)
    bias = jnp.where(col <= row, 0.0, -1e30).astype(jnp.float32)      # (T, T)

    # Single grid step by default: the whole batch fits trivially in VMEM and
    # extra steps are pure per-step overhead on 1-TC chips.
    Bb = B if batch_block is None else batch_block
    if B % Bb != 0:
        Bb = B
    grid = (B // Bb,)

    grid_spec = pltpu.PrefetchScalarGridSpec(
        num_scalar_prefetch=0,
        grid=grid,
        in_specs=[
            pl.BlockSpec((Bb, T, C), lambda b: (b, 0, 0)),
            # constant index_maps -> weights/bias stay VMEM-resident across grid
            pl.BlockSpec((C, 3 * H), lambda b: (0, 0)),
            pl.BlockSpec((T, T), lambda b: (0, 0)),
        ],
        out_specs=pl.BlockSpec((Bb, T, H), lambda b: (b, 0, 0)),
        scratch_shapes=[pltpu.VMEM((Bb * T, 3 * H), jnp.float32)],
    )

    # Advisory cost estimate for XLA's scheduler around this small call.
    flops = 2 * B * T * C * (3 * H) + 4 * B * T * T * H
    cost = pl.CostEstimate(
        flops=flops,
        transcendentals=B * T * T + B * T,
        bytes_accessed=(x_bf.size * 2 + w_bf.size * 2 + bias.size * 4
                        + B * T * H * jnp.dtype(out_dtype).itemsize),
    )

    return pl.pallas_call(
        _head_kernel,
        out_shape=jax.ShapeDtypeStruct((B, T, H), out_dtype),
        grid_spec=grid_spec,
        cost_estimate=cost,
        compiler_params=pltpu.CompilerParams(
            dimension_semantics=("parallel",)),
    )(x_bf, w_bf, bias)


def head_reference(x, w_key, w_query, w_value):
    """Pure-JAX reference matching the PyTorch forward (eval mode).

    Uses the same bf16-rounded inputs as the kernel (the kernel's intentional
    quantization), with full-precision f32 math everywhere else.
    """
    xf = x.astype(jnp.bfloat16).astype(jnp.float32)
    wk = w_key.astype(jnp.bfloat16).astype(jnp.float32)
    wq = w_query.astype(jnp.bfloat16).astype(jnp.float32)
    wv = w_value.astype(jnp.bfloat16).astype(jnp.float32)

    hi = lax.Precision.HIGHEST
    k = jnp.einsum('btc,hc->bth', xf, wk, precision=hi)
    q = jnp.einsum('btc,hc->bth', xf, wq, precision=hi)
    v = jnp.einsum('btc,hc->bth', xf, wv, precision=hi)

    wei = jnp.einsum('bqh,bkh->bqk', q, k, precision=hi) * (k.shape[-1] ** -0.5)
    T = x.shape[1]
    tril = jnp.tril(jnp.ones((BLOCKSIZE, BLOCKSIZE)))[:T, :T]
    wei = jnp.where(tril == 0, -jnp.inf, wei)
    wei = jax.nn.softmax(wei, axis=-1)
    return jnp.einsum('bqk,bkh->bqh', wei, v, precision=hi)


if __name__ == "__main__":
    key = jax.random.PRNGKey(0)
    kx, kk, kq, kv = jax.random.split(key, 4)

    B, T = 4, BLOCKSIZE                      # T = 64 (== blocksize)
    x = jax.random.normal(kx, (B, T, N_EMBD), dtype=jnp.float32)

    # deterministic nn.Linear-style weights: (head_size, n_embd), no bias
    bound = 1.0 / (N_EMBD ** 0.5)
    w_key = jax.random.uniform(kk, (HEAD_SIZE, N_EMBD), jnp.float32, -bound, bound)
    w_query = jax.random.uniform(kq, (HEAD_SIZE, N_EMBD), jnp.float32, -bound, bound)
    w_value = jax.random.uniform(kv, (HEAD_SIZE, N_EMBD), jnp.float32, -bound, bound)

    out = head_forward(x, w_key, w_query, w_value)
    out = jax.block_until_ready(out)

    ref = head_reference(x, w_key, w_query, w_value)
    assert out.shape == (B, T, HEAD_SIZE)
    # Tolerance accounts for bf16 MXU operands (projection, scores, PV) and
    # the EUP approx reciprocal in the softmax denominator; structural bugs
    # would produce O(0.1-1) errors.
    assert jnp.allclose(out, ref, atol=2e-2, rtol=2e-2), "mismatch vs reference"

    print("KERNEL_OK")
</pallas_src>

<mosaic_0001>
module attributes {stable_mosaic.version = 11 : i64} {
  func.func @_head_kernel(%arg0: i32, %arg1: memref<4x64x384xbf16, #tpu.memory_space<vmem>>, %arg2: memref<384x192xbf16, #tpu.memory_space<vmem>>, %arg3: memref<64x64xf32, #tpu.memory_space<vmem>>, %arg4: memref<4x64x64xf32, #tpu.memory_space<vmem>>, %arg5: memref<256x192xf32, #tpu.memory_space<vmem>>) attributes {dimension_semantics = [#tpu.dimension_semantics<parallel>], iteration_bounds = array<i64: 1>, scalar_prefetch = 0 : i64, scratch_operands = 1 : i64, tpu.core_type = #tpu.core_type<tc>, window_params = [{transform_indices = @transform_0, window_bounds = array<i64: 4, 64, 384>}, {pipeline_mode = #tpu.pipeline_mode<synchronous>, transform_indices = @transform_1, window_bounds = array<i64: 384, 192>}, {pipeline_mode = #tpu.pipeline_mode<synchronous>, transform_indices = @transform_2, window_bounds = array<i64: 64, 64>}, {transform_indices = @transform_3, window_bounds = array<i64: 4, 64, 64>}]} {
    %c0 = arith.constant 0 : index
    %c0_0 = arith.constant 0 : index
    %c0_1 = arith.constant 0 : index
    %0 = vector.load %arg1[%c0, %c0_0, %c0_1] : memref<4x64x384xbf16, #tpu.memory_space<vmem>>, vector<4x64x384xbf16>
    %1 = vector.shape_cast %0 : vector<4x64x384xbf16> to vector<256x384xbf16>
    %c0_2 = arith.constant 0 : index
    %c0_3 = arith.constant 0 : index
    %2 = vector.load %arg2[%c0_2, %c0_3] : memref<384x192xbf16, #tpu.memory_space<vmem>>, vector<384x192xbf16>
    %cst = arith.constant dense<0.000000e+00> : vector<256x192xf32>
    %3 = tpu.matmul %1, %2, %cst {dimension_numbers = #tpu.dot_dimension_numbers<[1], [0], [0], [1], [0, 0, 1, 1], [], []>} : vector<256x384xbf16>, vector<384x192xbf16>, vector<256x192xf32> -> vector<256x192xf32>
    %c0_4 = arith.constant 0 : index
    %c0_5 = arith.constant 0 : index
    %4 = vector.load %arg5[%c0_4, %c0_5] : memref<256x192xf32, #tpu.memory_space<vmem>>, vector<256x192xf32>
    tpu.vector_store %arg5[%c0_4, %c0_5], %3 {strides = array<i32>} : memref<256x192xf32, #tpu.memory_space<vmem>>, vector<256x192xf32>,
    %c0_6 = arith.constant 0 : index
    %c0_7 = arith.constant 0 : index
    %5 = vector.load %arg5[%c0_6, %c0_7] : memref<256x192xf32, #tpu.memory_space<vmem>>, vector<256x64xf32>
    %6 = arith.truncf %5 : vector<256x64xf32> to vector<256x64xbf16>
    %7 = vector.shape_cast %6 : vector<256x64xbf16> to vector<4x64x64xbf16>
    %c0_8 = arith.constant 0 : index
    %c64 = arith.constant 64 : index
    %8 = vector.load %arg5[%c0_8, %c64] : memref<256x192xf32, #tpu.memory_space<vmem>>, vector<256x64xf32>
    %9 = arith.truncf %8 : vector<256x64xf32> to vector<256x64xbf16>
    %10 = vector.shape_cast %9 : vector<256x64xbf16> to vector<4x64x64xbf16>
    %c0_9 = arith.constant 0 : index
    %c128 = arith.constant 128 : index
    %11 = vector.load %arg5[%c0_9, %c128] : memref<256x192xf32, #tpu.memory_space<vmem>>, vector<256x64xf32>
    %12 = arith.truncf %11 : vector<256x64xf32> to vector<256x64xbf16>
    %13 = vector.shape_cast %12 : vector<256x64xbf16> to vector<4x64x64xbf16>
    "tpu.trace_start"() <{level = 10 : i32, message = "bqd,bkd->bqk"}> : () -> ()
    %cst_10 = arith.constant dense<0.000000e+00> : vector<4x64x64xf32>
    %14 = tpu.matmul %7, %10, %cst_10 {dimension_numbers = #tpu.dot_dimension_numbers<[2], [2], [1], [1], [0, 0, 0, 1, 1, 1], [0], [0]>} : vector<4x64x64xbf16>, vector<4x64x64xbf16>, vector<4x64x64xf32> -> vector<4x64x64xf32>
    "tpu.trace_stop"() : () -> ()
    %c0_11 = arith.constant 0 : index
    %c0_12 = arith.constant 0 : index
    %15 = vector.load %arg3[%c0_11, %c0_12] : memref<64x64xf32, #tpu.memory_space<vmem>>, vector<64x64xf32>
    %16 = vector.shape_cast %15 : vector<64x64xf32> to vector<1x64x64xf32>
    %17 = vector.broadcast %16 : vector<1x64x64xf32> to vector<4x64x64xf32>
    %18 = arith.addf %14, %17 : vector<4x64x64xf32>
    %cst_13 = arith.constant dense<0xFF800000> : vector<4x64xf32>
    %19 = vector.multi_reduction <maximumf>, %18, %cst_13 [2] : vector<4x64x64xf32> to vector<4x64xf32>
    %20 = vector.shape_cast %19 : vector<4x64xf32> to vector<4x64x1xf32>
    %21 = vector.broadcast %20 : vector<4x64x1xf32> to vector<4x64x64xf32>
    %22 = arith.subf %18, %21 : vector<4x64x64xf32>
    %23 = math.exp %22 : vector<4x64x64xf32>
    %cst_14 = arith.constant dense<0.000000e+00> : vector<4x64xf32>
    %24 = vector.multi_reduction <add>, %23, %cst_14 [2] : vector<4x64x64xf32> to vector<4x64xf32>
    %25 = vector.shape_cast %24 : vector<4x64xf32> to vector<4x64x1xf32>
    %26 = tpu.reciprocal %25 {approx = true} : vector<4x64x1xf32> -> vector<4x64x1xf32>
    %27 = vector.broadcast %26 : vector<4x64x1xf32> to vector<4x64x64xf32>
    %28 = arith.mulf %23, %27 : vector<4x64x64xf32>
    %29 = arith.truncf %28 : vector<4x64x64xf32> to vector<4x64x64xbf16>
    "tpu.trace_start"() <{level = 10 : i32, message = "bqk,bkd->bqd"}> : () -> ()
    %cst_15 = arith.constant dense<0.000000e+00> : vector<4x64x64xf32>
    %30 = tpu.matmul %29, %13, %cst_15 {dimension_numbers = #tpu.dot_dimension_numbers<[2], [1], [1], [2], [0, 0, 0, 1, 1, 2], [0], [0]>} : vector<4x64x64xbf16>, vector<4x64x64xbf16>, vector<4x64x64xf32> -> vector<4x64x64xf32>
    "tpu.trace_stop"() : () -> ()
    %c0_16 = arith.constant 0 : index
    %c0_17 = arith.constant 0 : index
    %c0_18 = arith.constant 0 : index
    %31 = vector.load %arg4[%c0_16, %c0_17, %c0_18] : memref<4x64x64xf32, #tpu.memory_space<vmem>>, vector<4x64x64xf32>
    tpu.vector_store %arg4[%c0_16, %c0_17, %c0_18], %30 {strides = array<i32>} : memref<4x64x64xf32, #tpu.memory_space<vmem>>, vector<4x64x64xf32>,
    return
  }
  func.func @transform_0(%arg0: i32) -> (i32, i32, i32) {
    %c0_i32 = arith.constant 0 : i32
    %c0_i32_0 = arith.constant 0 : i32
    %c0_i32_1 = arith.constant 0 : i32
    return %arg0, %c0_i32, %c0_i32_0 : i32, i32, i32
  }
  func.func @transform_1(%arg0: i32) -> (i32, i32) {
    %c0_i32 = arith.constant 0 : i32
    %c0_i32_0 = arith.constant 0 : i32
    %c0_i32_1 = arith.constant 0 : i32
    return %c0_i32, %c0_i32_0 : i32, i32
  }
  func.func @transform_2(%arg0: i32) -> (i32, i32) {
    %c0_i32 = arith.constant 0 : i32
    %c0_i32_0 = arith.constant 0 : i32
    %c0_i32_1 = arith.constant 0 : i32
    return %c0_i32, %c0_i32_0 : i32, i32
  }
  func.func @transform_3(%arg0: i32) -> (i32, i32, i32) {
    %c0_i32 = arith.constant 0 : i32
    %c0_i32_0 = arith.constant 0 : i32
    %c0_i32_1 = arith.constant 0 : i32
    return %arg0, %c0_i32, %c0_i32_0 : i32, i32, i32
  }
}

</mosaic_0001>

<llo_original>
// kernel: tpu_custom_call.1
$region0: #{tpu_custom_call.1}
  #allocation0 [shape = 'u32[]', space=smem, size = 0x4, offset = 0x4, fixed_abs, tag = 'smem constant byte address 0x4 - core index']
  #allocation1 [shape = 'u32[72,128]{1,0:T(1,128)}', space=vmem, size = 0x9000, scoped, tag = 'internal scratch']
  #allocation2 [shape = 'f32[256,192]{1,0:T(8,128)}', space=vmem, size = 0x40000, scoped, tag = 'scratch operand']
  %s0 = inlined_call_operand.vmem [shape: bf16[4,64,384], index: 0, kind: input, shape index: {}]
  %s1 = inlined_call_operand.vmem [shape: bf16[384,192], index: 1, kind: input, shape index: {}]
  %s2 = inlined_call_operand.vmem [shape: f32[64,64], index: 2, kind: input, shape index: {}]
  %s3 = inlined_call_operand.hbm [shape: f32[4,64,64], index: 3, kind: output, shape index: {}]
  %s4 = sld [smem:[#allocation0]]
  $region22: #{tpu_custom_call.1} parent=0
    _
  %s6 = ssub.s32 1, %s4
  %s7 = scalar_select 0, %s6, %s4
  $region1: #{tpu_custom_call.1} parent=0
    #allocation3 [shape = 'u8[131072]{0}', space=vmem, size = 0x20000, scoped, tag = 'output window, operand 0, single buffered']
    #allocation4 [shape = 's32[1]{0}', space=sflag, size = 0x4, scoped, tag = 'scoped memory for tpu_custom_call.1']
    %8 = vsyncpa [#allocation4], 0
    // Predicated region
    $region2: #{tpu_custom_call.1} parent=1 // pred_check
      _
    $region3: #{tpu_custom_call.1} parent=1 // pred_check_branch
      %10 = sbr.rel (0) target = $region5
    $region4: #{tpu_custom_call.1} parent=1 // pred_region
      _
    $region5: #{tpu_custom_call.1} parent=1 // pred_fallthru
      _
    // Predicated region
    $region6: #{tpu_custom_call.1} parent=1 // pred_check
      _
    $region7: #{tpu_custom_call.1} parent=1 // pred_check_branch
      %12 = sbr.rel (0) target = $region9
    $region8: #{tpu_custom_call.1} parent=1 // pred_region
      _
    $region9: #{tpu_custom_call.1} parent=1 // pred_fallthru
      _
    // Predicated region
    $region10: #{tpu_custom_call.1} parent=1 // pred_check
      _
    $region11: #{tpu_custom_call.1} parent=1 // pred_check_branch
      %14 = sbr.rel (0) target = $region13
    $region12: #{tpu_custom_call.1} parent=1 // pred_region
      _
    $region13: #{tpu_custom_call.1} parent=1 // pred_fallthru
      _
    %v16 = vld [vmem:[%s0] sm:$0xff]
    %v17 = vld [vmem:[%s0 + $0x8] sm:$0xf]
    %v18 = vld [vmem:[%s0 + $0xc] sm:$0xff]
    %v19 = vld [vmem:[%s0 + $0x14] sm:$0xf]
    %v20 = vld [vmem:[%s0 + $0x18] sm:$0xff]
    %v21 = vld [vmem:[%s0 + $0x20] sm:$0xf]
    %v22 = vld [vmem:[%s0 + $0x24] sm:$0xff]
    %v23 = vld [vmem:[%s0 + $0x2c] sm:$0xf]
    %v24 = vld [vmem:[%s0 + $0x30] sm:$0xff]
    %v25 = vld [vmem:[%s0 + $0x38] sm:$0xf]
    %v26 = vld [vmem:[%s0 + $0x3c] sm:$0xff]
    %v27 = vld [vmem:[%s0 + $0x44] sm:$0xf]
    %v28 = vld [vmem:[%s0 + $0x48] sm:$0xff]
    %v29 = vld [vmem:[%s0 + $0x50] sm:$0xf]
    %v30 = vld [vmem:[%s0 + $0x54] sm:$0xff]
    %v31 = vld [vmem:[%s0 + $0x5c] sm:$0xf]
    %v32 = vld [vmem:[%s0 + $0x60] sm:$0xff]
    %v33 = vld [vmem:[%s0 + $0x68] sm:$0xf]
    %v34 = vld [vmem:[%s0 + $0x6c] sm:$0xff]
    %v35 = vld [vmem:[%s0 + $0x74] sm:$0xf]
    %v36 = vld [vmem:[%s0 + $0x78] sm:$0xff]
    %v37 = vld [vmem:[%s0 + $0x80] sm:$0xf]
    %v38 = vld [vmem:[%s0 + $0x84] sm:$0xff]
    %v39 = vld [vmem:[%s0 + $0x8c] sm:$0xf]
    %v40 = vld [vmem:[%s0 + $0x90] sm:$0xff]
    %v41 = vld [vmem:[%s0 + $0x98] sm:$0xf]
    %v42 = vld [vmem:[%s0 + $0x9c] sm:$0xff]
    %v43 = vld [vmem:[%s0 + $0xa4] sm:$0xf]
    %v44 = vld [vmem:[%s0 + $0xa8] sm:$0xff]
    %v45 = vld [vmem:[%s0 + $0xb0] sm:$0xf]
    %v46 = vld [vmem:[%s0 + $0xb4] sm:$0xff]
    %v47 = vld [vmem:[%s0 + $0xbc] sm:$0xf]
    %v48 = vld [vmem:[%s0 + $0xc0] sm:$0xff]
    %v49 = vld [vmem:[%s0 + $0xc8] sm:$0xf]
    %v50 = vld [vmem:[%s0 + $0xcc] sm:$0xff]
    %v51 = vld [vmem:[%s0 + $0xd4] sm:$0xf]
    %v52 = vld [vmem:[%s0 + $0xd8] sm:$0xff]
    %v53 = vld [vmem:[%s0 + $0xe0] sm:$0xf]
    %v54 = vld [vmem:[%s0 + $0xe4] sm:$0xff]
    %v55 = vld [vmem:[%s0 + $0xec] sm:$0xf]
    %v56 = vld [vmem:[%s0 + $0xf0] sm:$0xff]
    %v57 = vld [vmem:[%s0 + $0xf8] sm:$0xf]
    %v58 = vld [vmem:[%s0 + $0xfc] sm:$0xff]
    %v59 = vld [vmem:[%s0 + $0x104] sm:$0xf]
    %v60 = vld [vmem:[%s0 + $0x108] sm:$0xff]
    %v61 = vld [vmem:[%s0 + $0x110] sm:$0xf]
    %v62 = vld [vmem:[%s0 + $0x114] sm:$0xff]
    %v63 = vld [vmem:[%s0 + $0x11c] sm:$0xf]
    %v64 = vld [vmem:[%s0 + $0x120] sm:$0xff]
    %v65 = vld [vmem:[%s0 + $0x128] sm:$0xf]
    %v66 = vld [vmem:[%s0 + $0x12c] sm:$0xff]
    %v67 = vld [vmem:[%s0 + $0x134] sm:$0xf]
    %v68 = vld [vmem:[%s0 + $0x138] sm:$0xff]
    %v69 = vld [vmem:[%s0 + $0x140] sm:$0xf]
    %v70 = vld [vmem:[%s0 + $0x144] sm:$0xff]
    %v71 = vld [vmem:[%s0 + $0x14c] sm:$0xf]
    %v72 = vld [vmem:[%s0 + $0x150] sm:$0xff]
    %v73 = vld [vmem:[%s0 + $0x158] sm:$0xf]
    %v74 = vld [vmem:[%s0 + $0x15c] sm:$0xff]
    %v75 = vld [vmem:[%s0 + $0x164] sm:$0xf]
    %v76 = vld [vmem:[%s0 + $0x168] sm:$0xff]
    %v77 = vld [vmem:[%s0 + $0x170] sm:$0xf]
    %v78 = vld [vmem:[%s0 + $0x174] sm:$0xff]
    %v79 = vld [vmem:[%s0 + $0x17c] sm:$0xf]
    %v80 = vld [vmem:[%s1] sm:$0xff]
    %v81 = vld [vmem:[%s1 + $0x8] sm:$0xff]
    %v82 = vld [vmem:[%s1 + $0x10] sm:$0xff]
    %v83 = vld [vmem:[%s1 + $0x18] sm:$0xff]
    %v84 = vld [vmem:[%s1 + $0x20] sm:$0xff]
    %v85 = vld [vmem:[%s1 + $0x28] sm:$0xff]
    %v86 = vld [vmem:[%s1 + $0x30] sm:$0xff]
    %v87 = vld [vmem:[%s1 + $0x38] sm:$0xff]
    %v88 = vld [vmem:[%s1 + $0x40] sm:$0xff]
    %v89 = vld [vmem:[%s1 + $0x48] sm:$0xff]
    %v90 = vld [vmem:[%s1 + $0x50] sm:$0xff]
    %v91 = vld [vmem:[%s1 + $0x58] sm:$0xff]
    %v92 = vld [vmem:[%s1 + $0x60] sm:$0xff]
    %v93 = vld [vmem:[%s1 + $0x68] sm:$0xff]
    %v94 = vld [vmem:[%s1 + $0x70] sm:$0xff]
    %v95 = vld [vmem:[%s1 + $0x78] sm:$0xff]
    %v96 = vld [vmem:[%s1 + $0x80] sm:$0xff]
    %v97 = vld [vmem:[%s1 + $0x88] sm:$0xff]
    %v98 = vld [vmem:[%s1 + $0x90] sm:$0xff]
    %v99 = vld [vmem:[%s1 + $0x98] sm:$0xff]
    %v100 = vld [vmem:[%s1 + $0xa0] sm:$0xff]
    %v101 = vld [vmem:[%s1 + $0xa8] sm:$0xff]
    %v102 = vld [vmem:[%s1 + $0xb0] sm:$0xff]
    %v103 = vld [vmem:[%s1 + $0xb8] sm:$0xff]
    %v104 = vld [vmem:[%s1 + $0xc0] sm:$0xff]
    %v105 = vld [vmem:[%s1 + $0xc8] sm:$0xff]
    %v106 = vld [vmem:[%s1 + $0xd0] sm:$0xff]
    %v107 = vld [vmem:[%s1 + $0xd8] sm:$0xff]
    %v108 = vld [vmem:[%s1 + $0xe0] sm:$0xff]
    %v109 = vld [vmem:[%s1 + $0xe8] sm:$0xff]
    %v110 = vld [vmem:[%s1 + $0xf0] sm:$0xff]
    %v111 = vld [vmem:[%s1 + $0xf8] sm:$0xff]
    %v112 = vld [vmem:[%s1 + $0x100] sm:$0xff]
    %v113 = vld [vmem:[%s1 + $0x108] sm:$0xff]
    %v114 = vld [vmem:[%s1 + $0x110] sm:$0xff]
    %v115 = vld [vmem:[%s1 + $0x118] sm:$0xff]
    %v116 = vld [vmem:[%s1 + $0x120] sm:$0xff]
    %v117 = vld [vmem:[%s1 + $0x128] sm:$0xff]
    %v118 = vld [vmem:[%s1 + $0x130] sm:$0xff]
    %v119 = vld [vmem:[%s1 + $0x138] sm:$0xff]
    %v120 = vld [vmem:[%s1 + $0x140] sm:$0xff]
    %v121 = vld [vmem:[%s1 + $0x148] sm:$0xff]
    %v122 = vld [vmem:[%s1 + $0x150] sm:$0xff]
    %v123 = vld [vmem:[%s1 + $0x158] sm:$0xff]
    %v124 = vld [vmem:[%s1 + $0x160] sm:$0xff]
    %v125 = vld [vmem:[%s1 + $0x168] sm:$0xff]
    %v126 = vld [vmem:[%s1 + $0x170] sm:$0xff]
    %v127 = vld [vmem:[%s1 + $0x178] sm:$0xff]
    %v192 = vunpack.c.l.b16 %v16
    %v193 = vunpack.c.h.b16 %v16
    %v194 = vunpack.c.l.b16 %v17
    %v195 = vunpack.c.l.b16 %v18
    %v196 = vunpack.c.h.b16 %v18
    %v197 = vunpack.c.l.b16 %v19
    %v198 = vunpack.c.l.b16 %v20
    %v199 = vunpack.c.h.b16 %v20
    %v200 = vunpack.c.l.b16 %v21
    %v201 = vunpack.c.l.b16 %v22
    %v202 = vunpack.c.h.b16 %v22
    %v203 = vunpack.c.l.b16 %v23
    %v204 = vunpack.c.l.b16 %v24
    %v205 = vunpack.c.h.b16 %v24
    %v206 = vunpack.c.l.b16 %v25
    %v207 = vunpack.c.l.b16 %v26
    %v208 = vunpack.c.h.b16 %v26
    %v209 = vunpack.c.l.b16 %v27
    %v210 = vunpack.c.l.b16 %v28
    %v211 = vunpack.c.h.b16 %v28
    %v212 = vunpack.c.l.b16 %v29
    %v213 = vunpack.c.l.b16 %v30
    %v214 = vunpack.c.h.b16 %v30
    %v215 = vunpack.c.l.b16 %v31
    %v216 = vunpack.c.l.b16 %v32
    %v217 = vunpack.c.h.b16 %v32
    %v218 = vunpack.c.l.b16 %v33
    %v219 = vunpack.c.l.b16 %v34
    %v220 = vunpack.c.h.b16 %v34
    %v221 = vunpack.c.l.b16 %v35
    %v222 = vunpack.c.l.b16 %v36
    %v223 = vunpack.c.h.b16 %v36
    %v224 = vunpack.c.l.b16 %v37
    %v225 = vunpack.c.l.b16 %v38
    %v226 = vunpack.c.h.b16 %v38
    %v227 = vunpack.c.l.b16 %v39
    %v228 = vunpack.c.l.b16 %v40
    %v229 = vunpack.c.h.b16 %v40
    %v230 = vunpack.c.l.b16 %v41
    %v231 = vunpack.c.l.b16 %v42
    %v232 = vunpack.c.h.b16 %v42
    %v233 = vunpack.c.l.b16 %v43
    %v234 = vunpack.c.l.b16 %v44
    %v235 = vunpack.c.h.b16 %v44
    %v236 = vunpack.c.l.b16 %v45
    %v237 = vunpack.c.l.b16 %v46
    %v238 = vunpack.c.h.b16 %v46
    %v239 = vunpack.c.l.b16 %v47
    %v240 = vunpack.c.l.b16 %v48
    %v241 = vunpack.c.h.b16 %v48
    %v242 = vunpack.c.l.b16 %v49
    %v243 = vunpack.c.l.b16 %v50
    %v244 = vunpack.c.h.b16 %v50
    %v245 = vunpack.c.l.b16 %v51
    %v246 = vunpack.c.l.b16 %v52
    %v247 = vunpack.c.h.b16 %v52
    %v248 = vunpack.c.l.b16 %v53
    %v249 = vunpack.c.l.b16 %v54
    %v250 = vunpack.c.h.b16 %v54
    %v251 = vunpack.c.l.b16 %v55
    %v252 = vunpack.c.l.b16 %v56
    %v253 = vunpack.c.h.b16 %v56
    %v254 = vunpack.c.l.b16 %v57
    %v255 = vunpack.c.l.b16 %v58
    %v256 = vunpack.c.h.b16 %v58
    %v257 = vunpack.c.l.b16 %v59
    %v258 = vunpack.c.l.b16 %v60
    %v259 = vunpack.c.h.b16 %v60
    %v260 = vunpack.c.l.b16 %v61
    %v261 = vunpack.c.l.b16 %v62
    %v262 = vunpack.c.h.b16 %v62
    %v263 = vunpack.c.l.b16 %v63
    %v264 = vunpack.c.l.b16 %v64
    %v265 = vunpack.c.h.b16 %v64
    %v266 = vunpack.c.l.b16 %v65
    %v267 = vunpack.c.l.b16 %v66
    %v268 = vunpack.c.h.b16 %v66
    %v269 = vunpack.c.l.b16 %v67
    %v270 = vunpack.c.l.b16 %v68
    %v271 = vunpack.c.h.b16 %v68
    %v272 = vunpack.c.l.b16 %v69
    %v273 = vunpack.c.l.b16 %v70
    %v274 = vunpack.c.h.b16 %v70
    %v275 = vunpack.c.l.b16 %v71
    %v276 = vunpack.c.l.b16 %v72
    %v277 = vunpack.c.h.b16 %v72
    %v278 = vunpack.c.l.b16 %v73
    %v279 = vunpack.c.l.b16 %v74
    %v280 = vunpack.c.h.b16 %v74
    %v281 = vunpack.c.l.b16 %v75
    %v282 = vunpack.c.l.b16 %v76
    %v283 = vunpack.c.h.b16 %v76
    %v284 = vunpack.c.l.b16 %v77
    %v285 = vunpack.c.l.b16 %v78
    %v286 = vunpack.c.h.b16 %v78
    %v287 = vunpack.c.l.b16 %v79
    %v288 = vpack.c.b16 %v195, %v192
    %v289 = vpack.c.b16 %v196, %v193
    %v290 = vpack.c.b16 %v197, %v194
    %v291 = vpack.c.b16 %v201, %v198
    %v292 = vpack.c.b16 %v202, %v199
    %v293 = vpack.c.b16 %v203, %v200
    %v294 = vpack.c.b16 %v207, %v204
    %v295 = vpack.c.b16 %v208, %v205
    %v296 = vpack.c.b16 %v209, %v206
    %v297 = vpack.c.b16 %v213, %v210
    %v298 = vpack.c.b16 %v214, %v211
    %v299 = vpack.c.b16 %v215, %v212
    %v300 = vpack.c.b16 %v219, %v216
    %v301 = vpack.c.b16 %v220, %v217
    %v302 = vpack.c.b16 %v221, %v218
    %v303 = vpack.c.b16 %v225, %v222
    %v304 = vpack.c.b16 %v226, %v223
    %v305 = vpack.c.b16 %v227, %v224
    %v306 = vpack.c.b16 %v231, %v228
    %v307 = vpack.c.b16 %v232, %v229
    %v308 = vpack.c.b16 %v233, %v230
    %v309 = vpack.c.b16 %v237, %v234
    %v310 = vpack.c.b16 %v238, %v235
    %v311 = vpack.c.b16 %v239, %v236
    %v312 = vpack.c.b16 %v243, %v240
    %v313 = vpack.c.b16 %v244, %v241
    %v314 = vpack.c.b16 %v245, %v242
    %v315 = vpack.c.b16 %v249, %v246
    %v316 = vpack.c.b16 %v250, %v247
    %v317 = vpack.c.b16 %v251, %v248
    %v318 = vpack.c.b16 %v255, %v252
    %v319 = vpack.c.b16 %v256, %v253
    %v320 = vpack.c.b16 %v257, %v254
    %v321 = vpack.c.b16 %v261, %v258
    %v322 = vpack.c.b16 %v262, %v259
    %v323 = vpack.c.b16 %v263, %v260
    %v324 = vpack.c.b16 %v267, %v264
    %v325 = vpack.c.b16 %v268, %v265
    %v326 = vpack.c.b16 %v269, %v266
    %v327 = vpack.c.b16 %v273, %v270
    %v328 = vpack.c.b16 %v274, %v271
    %v329 = vpack.c.b16 %v275, %v272
    %v330 = vpack.c.b16 %v279, %v276
    %v331 = vpack.c.b16 %v280, %v277
    %v332 = vpack.c.b16 %v281, %v278
    %v333 = vpack.c.b16 %v285, %v282
    %v334 = vpack.c.b16 %v286, %v283
    %v335 = vpack.c.b16 %v287, %v284
    %v432 = vunpack.c.l.b16 %v80
    %v433 = vunpack.c.h.b16 %v80
    %v434 = vunpack.c.l.b16 %v81
    %v435 = vunpack.c.h.b16 %v81
    %v436 = vunpack.c.l.b16 %v82
    %v437 = vunpack.c.h.b16 %v82
    %v438 = vunpack.c.l.b16 %v83
    %v439 = vunpack.c.h.b16 %v83
    %v440 = vunpack.c.l.b16 %v84
    %v441 = vunpack.c.h.b16 %v84
    %v442 = vunpack.c.l.b16 %v85
    %v443 = vunpack.c.h.b16 %v85
    %v444 = vunpack.c.l.b16 %v86
    %v445 = vunpack.c.h.b16 %v86
    %v446 = vunpack.c.l.b16 %v87
    %v447 = vunpack.c.h.b16 %v87
    %v448 = vunpack.c.l.b16 %v88
    %v449 = vunpack.c.h.b16 %v88
    %v450 = vunpack.c.l.b16 %v89
    %v451 = vunpack.c.h.b16 %v89
    %v452 = vunpack.c.l.b16 %v90
    %v453 = vunpack.c.h.b16 %v90
    %v454 = vunpack.c.l.b16 %v91
    %v455 = vunpack.c.h.b16 %v91
    %v456 = vunpack.c.l.b16 %v92
    %v457 = vunpack.c.h.b16 %v92
    %v458 = vunpack.c.l.b16 %v93
    %v459 = vunpack.c.h.b16 %v93
    %v460 = vunpack.c.l.b16 %v94
    %v461 = vunpack.c.h.b16 %v94
    %v462 = vunpack.c.l.b16 %v95
    %v463 = vunpack.c.h.b16 %v95
    %v464 = vunpack.c.l.b16 %v96
    %v465 = vunpack.c.h.b16 %v96
    %v466 = vunpack.c.l.b16 %v97
    %v467 = vunpack.c.h.b16 %v97
    %v468 = vunpack.c.l.b16 %v98
    %v469 = vunpack.c.h.b16 %v98
    %v470 = vunpack.c.l.b16 %v99
    %v471 = vunpack.c.h.b16 %v99
    %v472 = vunpack.c.l.b16 %v100
    %v473 = vunpack.c.h.b16 %v100
    %v474 = vunpack.c.l.b16 %v101
    %v475 = vunpack.c.h.b16 %v101
    %v476 = vunpack.c.l.b16 %v102
    %v477 = vunpack.c.h.b16 %v102
    %v478 = vunpack.c.l.b16 %v103
    %v479 = vunpack.c.h.b16 %v103
    %v480 = vunpack.c.l.b16 %v104
    %v481 = vunpack.c.h.b16 %v104
    %v482 = vunpack.c.l.b16 %v105
    %v483 = vunpack.c.h.b16 %v105
    %v484 = vunpack.c.l.b16 %v106
    %v485 = vunpack.c.h.b16 %v106
    %v486 = vunpack.c.l.b16 %v107
    %v487 = vunpack.c.h.b16 %v107
    %v488 = vunpack.c.l.b16 %v108
    %v489 = vunpack.c.h.b16 %v108
    %v490 = vunpack.c.l.b16 %v109
    %v491 = vunpack.c.h.b16 %v109
    %v492 = vunpack.c.l.b16 %v110
    %v493 = vunpack.c.h.b16 %v110
    %v494 = vunpack.c.l.b16 %v111
    %v495 = vunpack.c.h.b16 %v111
    %v496 = vunpack.c.l.b16 %v112
    %v497 = vunpack.c.h.b16 %v112
    %v498 = vunpack.c.l.b16 %v113
    %v499 = vunpack.c.h.b16 %v113
    %v500 = vunpack.c.l.b16 %v114
    %v501 = vunpack.c.h.b16 %v114
    %v502 = vunpack.c.l.b16 %v115
    %v503 = vunpack.c.h.b16 %v115
    %v504 = vunpack.c.l.b16 %v116
    %v505 = vunpack.c.h.b16 %v116
    %v506 = vunpack.c.l.b16 %v117
    %v507 = vunpack.c.h.b16 %v117
    %v508 = vunpack.c.l.b16 %v118
    %v509 = vunpack.c.h.b16 %v118
    %v510 = vunpack.c.l.b16 %v119
    %v511 = vunpack.c.h.b16 %v119
    %v512 = vunpack.c.l.b16 %v120
    %v513 = vunpack.c.h.b16 %v120
    %v514 = vunpack.c.l.b16 %v121
    %v515 = vunpack.c.h.b16 %v121
    %v516 = vunpack.c.l.b16 %v122
    %v517 = vunpack.c.h.b16 %v122
    %v518 = vunpack.c.l.b16 %v123
    %v519 = vunpack.c.h.b16 %v123
    %v520 = vunpack.c.l.b16 %v124
    %v521 = vunpack.c.h.b16 %v124
    %v522 = vunpack.c.l.b16 %v125
    %v523 = vunpack.c.h.b16 %v125
    %v524 = vunpack.c.l.b16 %v126
    %v525 = vunpack.c.h.b16 %v126
    %v526 = vunpack.c.l.b16 %v127
    %v527 = vunpack.c.h.b16 %v127
    %v528 = vpack.c.b16 %v434, %v432
    %v529 = vpack.c.b16 %v435, %v433
    %v530 = vpack.c.b16 %v438, %v436
    %v531 = vpack.c.b16 %v439, %v437
    %v532 = vpack.c.b16 %v442, %v440
    %v533 = vpack.c.b16 %v443, %v441
    %v534 = vpack.c.b16 %v446, %v444
    %v535 = vpack.c.b16 %v447, %v445
    %v536 = vpack.c.b16 %v450, %v448
    %v537 = vpack.c.b16 %v451, %v449
    %v538 = vpack.c.b16 %v454, %v452
    %v539 = vpack.c.b16 %v455, %v453
    %v540 = vpack.c.b16 %v458, %v456
    %v541 = vpack.c.b16 %v459, %v457
    %v542 = vpack.c.b16 %v462, %v460
    %v543 = vpack.c.b16 %v463, %v461
    %v544 = vpack.c.b16 %v466, %v464
    %v545 = vpack.c.b16 %v467, %v465
    %v546 = vpack.c.b16 %v470, %v468
    %v547 = vpack.c.b16 %v471, %v469
    %v548 = vpack.c.b16 %v474, %v472
    %v549 = vpack.c.b16 %v475, %v473
    %v550 = vpack.c.b16 %v478, %v476
    %v551 = vpack.c.b16 %v479, %v477
    %v552 = vpack.c.b16 %v482, %v480
    %v553 = vpack.c.b16 %v483, %v481
    %v554 = vpack.c.b16 %v486, %v484
    %v555 = vpack.c.b16 %v487, %v485
    %v556 = vpack.c.b16 %v490, %v488
    %v557 = vpack.c.b16 %v491, %v489
    %v558 = vpack.c.b16 %v494, %v492
    %v559 = vpack.c.b16 %v495, %v493
    %v560 = vpack.c.b16 %v498, %v496
    %v561 = vpack.c.b16 %v499, %v497
    %v562 = vpack.c.b16 %v502, %v500
    %v563 = vpack.c.b16 %v503, %v501
    %v564 = vpack.c.b16 %v506, %v504
    %v565 = vpack.c.b16 %v507, %v505
    %v566 = vpack.c.b16 %v510, %v508
    %v567 = vpack.c.b16 %v511, %v509
    %v568 = vpack.c.b16 %v514, %v512
    %v569 = vpack.c.b16 %v515, %v513
    %v570 = vpack.c.b16 %v518, %v516
    %v571 = vpack.c.b16 %v519, %v517
    %v572 = vpack.c.b16 %v522, %v520
    %v573 = vpack.c.b16 %v523, %v521
    %v574 = vpack.c.b16 %v526, %v524
    %v575 = vpack.c.b16 %v527, %v525
    %624 = vmatpush.bf16.msra.mxu0 %v542
    %625 = vmatpush.bf16.msra.mxu0 %v540
    %626 = vmatpush.bf16.msra.mxu0 %v538
    %627 = vmatpush.bf16.msra.mxu0 %v536
    %628 = vmatpush.bf16.msra.mxu0 %v534
    %629 = vmatpush.bf16.msra.mxu0 %v532
    %630 = vmatpush.bf16.msra.mxu0 %v530
    %631 = vmatpush.bf16.msra.mxu0 %v528
    %632 = vmatmul.bf16.gmra.mxu0 %v288
    %v633 = vpop.f32.mrf.mxu0
    %v634 = vadd.f32 0.0, %v633
    %v635 = vpop.f32.mrf.mxu0
    %v636 = vadd.f32 0.0, %v635
    %637 = vmatmul.bf16.gmra.mxu0 %v291
    %v638 = vpop.f32.mrf.mxu0
    %v639 = vadd.f32 0.0, %v638
    %v640 = vpop.f32.mrf.mxu0
    %v641 = vadd.f32 0.0, %v640
    %642 = vmatmul.bf16.gmra.mxu0 %v294
    %v643 = vpop.f32.mrf.mxu0
    %v644 = vadd.f32 0.0, %v643
    %v645 = vpop.f32.mrf.mxu0
    %v646 = vadd.f32 0.0, %v645
    %647 = vmatmul.bf16.gmra.mxu0 %v297
    %v648 = vpop.f32.mrf.mxu0
    %v649 = vadd.f32 0.0, %v648
    %v650 = vpop.f32.mrf.mxu0
    %v651 = vadd.f32 0.0, %v650
    %652 = vmatmul.bf16.gmra.mxu0 %v300
    %v653 = vpop.f32.mrf.mxu0
    %v654 = vadd.f32 0.0, %v653
    %v655 = vpop.f32.mrf.mxu0
    %v656 = vadd.f32 0.0, %v655
    %657 = vmatmul.bf16.gmra.mxu0 %v303
    %v658 = vpop.f32.mrf.mxu0
    %v659 = vadd.f32 0.0, %v658
    %v660 = vpop.f32.mrf.mxu0
    %v661 = vadd.f32 0.0, %v660
    %662 = vmatmul.bf16.gmra.mxu0 %v306
    %v663 = vpop.f32.mrf.mxu0
    %v664 = vadd.f32 0.0, %v663
    %v665 = vpop.f32.mrf.mxu0
    %v666 = vadd.f32 0.0, %v665
    %667 = vmatmul.bf16.gmra.mxu0 %v309
    %v668 = vpop.f32.mrf.mxu0
    %v669 = vadd.f32 0.0, %v668
    %v670 = vpop.f32.mrf.mxu0
    %v671 = vadd.f32 0.0, %v670
    %672 = vmatmul.bf16.gmra.mxu0 %v312
    %v673 = vpop.f32.mrf.mxu0
    %v674 = vadd.f32 0.0, %v673
    %v675 = vpop.f32.mrf.mxu0
    %v676 = vadd.f32 0.0, %v675
    %677 = vmatmul.bf16.gmra.mxu0 %v315
    %v678 = vpop.f32.mrf.mxu0
    %v679 = vadd.f32 0.0, %v678
    %v680 = vpop.f32.mrf.mxu0
    %v681 = vadd.f32 0.0, %v680
    %682 = vmatmul.bf16.gmra.mxu0 %v318
    %v683 = vpop.f32.mrf.mxu0
    %v684 = vadd.f32 0.0, %v683
    %v685 = vpop.f32.mrf.mxu0
    %v686 = vadd.f32 0.0, %v685
    %687 = vmatmul.bf16.gmra.mxu0 %v321
    %v688 = vpop.f32.mrf.mxu0
    %v689 = vadd.f32 0.0, %v688
    %v690 = vpop.f32.mrf.mxu0
    %v691 = vadd.f32 0.0, %v690
    %692 = vmatmul.bf16.gmra.mxu0 %v324
    %v693 = vpop.f32.mrf.mxu0
    %v694 = vadd.f32 0.0, %v693
    %v695 = vpop.f32.mrf.mxu0
    %v696 = vadd.f32 0.0, %v695
    %697 = vmatmul.bf16.gmra.mxu0 %v327
    %v698 = vpop.f32.mrf.mxu0
    %v699 = vadd.f32 0.0, %v698
    %v700 = vpop.f32.mrf.mxu0
    %v701 = vadd.f32 0.0, %v700
    %702 = vmatmul.bf16.gmra.mxu0 %v330
    %v703 = vpop.f32.mrf.mxu0
    %v704 = vadd.f32 0.0, %v703
    %v705 = vpop.f32.mrf.mxu0
    %v706 = vadd.f32 0.0, %v705
    %707 = vmatmul.bf16.gmra.mxu0 %v333
    %v708 = vpop.f32.mrf.mxu0
    %v709 = vadd.f32 0.0, %v708
    %v710 = vpop.f32.mrf.mxu0
    %v711 = vadd.f32 0.0, %v710
    %712 = vdwg.mxu0
    %713 = vmatpush.bf16.msra.mxu0 %v558
    %714 = vmatpush.bf16.msra.mxu0 %v556
    %715 = vmatpush.bf16.msra.mxu0 %v554
    %716 = vmatpush.bf16.msra.mxu0 %v552
    %717 = vmatpush.bf16.msra.mxu0 %v550
    %718 = vmatpush.bf16.msra.mxu0 %v548
    %719 = vmatpush.bf16.msra.mxu0 %v546
    %720 = vmatpush.bf16.msra.mxu0 %v544
    %721 = vmatmul.bf16.gmra.mxu0 %v289
    %v722 = vpop.f32.mrf.mxu0
    %v723 = vadd.f32 %v634, %v722
    %v724 = vpop.f32.mrf.mxu0
    %v725 = vadd.f32 %v636, %v724
    %726 = vmatmul.bf16.gmra.mxu0 %v292
    %v727 = vpop.f32.mrf.mxu0
    %v728 = vadd.f32 %v639, %v727
    %v729 = vpop.f32.mrf.mxu0
    %v730 = vadd.f32 %v641, %v729
    %731 = vmatmul.bf16.gmra.mxu0 %v295
    %v732 = vpop.f32.mrf.mxu0
    %v733 = vadd.f32 %v644, %v732
    %v734 = vpop.f32.mrf.mxu0
    %v735 = vadd.f32 %v646, %v734
    %736 = vmatmul.bf16.gmra.mxu0 %v298
    %v737 = vpop.f32.mrf.mxu0
    %v738 = vadd.f32 %v649, %v737
    %v739 = vpop.f32.mrf.mxu0
    %v740 = vadd.f32 %v651, %v739
    %741 = vmatmul.bf16.gmra.mxu0 %v301
    %v742 = vpop.f32.mrf.mxu0
    %v743 = vadd.f32 %v654, %v742
    %v744 = vpop.f32.mrf.mxu0
    %v745 = vadd.f32 %v656, %v744
    %746 = vmatmul.bf16.gmra.mxu0 %v304
    %v747 = vpop.f32.mrf.mxu0
    %v748 = vadd.f32 %v659, %v747
    %v749 = vpop.f32.mrf.mxu0
    %v750 = vadd.f32 %v661, %v749
    %751 = vmatmul.bf16.gmra.mxu0 %v307
    %v752 = vpop.f32.mrf.mxu0
    %v753 = vadd.f32 %v664, %v752
    %v754 = vpop.f32.mrf.mxu0
    %v755 = vadd.f32 %v666, %v754
    %756 = vmatmul.bf16.gmra.mxu0 %v310
    %v757 = vpop.f32.mrf.mxu0
    %v758 = vadd.f32 %v669, %v757
    %v759 = vpop.f32.mrf.mxu0
    %v760 = vadd.f32 %v671, %v759
    %761 = vmatmul.bf16.gmra.mxu0 %v313
    %v762 = vpop.f32.mrf.mxu0
    %v763 = vadd.f32 %v674, %v762
    %v764 = vpop.f32.mrf.mxu0
    %v765 = vadd.f32 %v676, %v764
    %766 = vmatmul.bf16.gmra.mxu0 %v316
    %v767 = vpop.f32.mrf.mxu0
    %v768 = vadd.f32 %v679, %v767
    %v769 = vpop.f32.mrf.mxu0
    %v770 = vadd.f32 %v681, %v769
    %771 = vmatmul.bf16.gmra.mxu0 %v319
    %v772 = vpop.f32.mrf.mxu0
    %v773 = vadd.f32 %v684, %v772
    %v774 = vpop.f32.mrf.mxu0
    %v775 = vadd.f32 %v686, %v774
    %776 = vmatmul.bf16.gmra.mxu0 %v322
    %v777 = vpop.f32.mrf.mxu0
    %v778 = vadd.f32 %v689, %v777
    %v779 = vpop.f32.mrf.mxu0
    %v780 = vadd.f32 %v691, %v779
    %781 = vmatmul.bf16.gmra.mxu0 %v325
    %v782 = vpop.f32.mrf.mxu0
    %v783 = vadd.f32 %v694, %v782
    %v784 = vpop.f32.mrf.mxu0
    %v785 = vadd.f32 %v696, %v784
    %786 = vmatmul.bf16.gmra.mxu0 %v328
    %v787 = vpop.f32.mrf.mxu0
    %v788 = vadd.f32 %v699, %v787
    %v789 = vpop.f32.mrf.mxu0
    %v790 = vadd.f32 %v701, %v789
    %791 = vmatmul.bf16.gmra.mxu0 %v331
    %v792 = vpop.f32.mrf.mxu0
    %v793 = vadd.f32 %v704, %v792
    %v794 = vpop.f32.mrf.mxu0
    %v795 = vadd.f32 %v706, %v794
    %796 = vmatmul.bf16.gmra.mxu0 %v334
    %v797 = vpop.f32.mrf.mxu0
    %v798 = vadd.f32 %v709, %v797
    %v799 = vpop.f32.mrf.mxu0
    %v800 = vadd.f32 %v711, %v799
    %801 = vdwg.mxu0
    %802 = vmatpush.bf16.msra.mxu0 %v574
    %803 = vmatpush.bf16.msra.mxu0 %v572
    %804 = vmatpush.bf16.msra.mxu0 %v570
    %805 = vmatpush.bf16.msra.mxu0 %v568
    %806 = vmatpush.bf16.msra.mxu0 %v566
    %807 = vmatpush.bf16.msra.mxu0 %v564
    %808 = vmatpush.bf16.msra.mxu0 %v562
    %809 = vmatpush.bf16.msra.mxu0 %v560
    %810 = vmatmul.bf16.gmra.mxu0 %v290
    %v811 = vpop.f32.mrf.mxu0
    %v812 = vadd.f32 %v723, %v811
    %v813 = vpop.f32.mrf.mxu0
    %v814 = vadd.f32 %v725, %v813
    %815 = vmatmul.bf16.gmra.mxu0 %v293
    %v816 = vpop.f32.mrf.mxu0
    %v817 = vadd.f32 %v728, %v816
    %v818 = vpop.f32.mrf.mxu0
    %v819 = vadd.f32 %v730, %v818
    %820 = vmatmul.bf16.gmra.mxu0 %v296
    %v821 = vpop.f32.mrf.mxu0
    %v822 = vadd.f32 %v733, %v821
    %v823 = vpop.f32.mrf.mxu0
    %v824 = vadd.f32 %v735, %v823
    %825 = vmatmul.bf16.gmra.mxu0 %v299
    %v826 = vpop.f32.mrf.mxu0
    %v827 = vadd.f32 %v738, %v826
    %v828 = vpop.f32.mrf.mxu0
    %v829 = vadd.f32 %v740, %v828
    %830 = vmatmul.bf16.gmra.mxu0 %v302
    %v831 = vpop.f32.mrf.mxu0
    %v832 = vadd.f32 %v743, %v831
    %v833 = vpop.f32.mrf.mxu0
    %v834 = vadd.f32 %v745, %v833
    %835 = vmatmul.bf16.gmra.mxu0 %v305
    %v836 = vpop.f32.mrf.mxu0
    %v837 = vadd.f32 %v748, %v836
    %v838 = vpop.f32.mrf.mxu0
    %v839 = vadd.f32 %v750, %v838
    %840 = vmatmul.bf16.gmra.mxu0 %v308
    %v841 = vpop.f32.mrf.mxu0
    %v842 = vadd.f32 %v753, %v841
    %v843 = vpop.f32.mrf.mxu0
    %v844 = vadd.f32 %v755, %v843
    %845 = vmatmul.bf16.gmra.mxu0 %v311
    %v846 = vpop.f32.mrf.mxu0
    %v847 = vadd.f32 %v758, %v846
    %v848 = vpop.f32.mrf.mxu0
    %v849 = vadd.f32 %v760, %v848
    %850 = vmatmul.bf16.gmra.mxu0 %v314
    %v851 = vpop.f32.mrf.mxu0
    %v852 = vadd.f32 %v763, %v851
    %v853 = vpop.f32.mrf.mxu0
    %v854 = vadd.f32 %v765, %v853
    %855 = vmatmul.bf16.gmra.mxu0 %v317
    %v856 = vpop.f32.mrf.mxu0
    %v857 = vadd.f32 %v768, %v856
    %v858 = vpop.f32.mrf.mxu0
    %v859 = vadd.f32 %v770, %v858
    %860 = vmatmul.bf16.gmra.mxu0 %v320
    %v861 = vpop.f32.mrf.mxu0
    %v862 = vadd.f32 %v773, %v861
    %v863 = vpop.f32.mrf.mxu0
    %v864 = vadd.f32 %v775, %v863
    %865 = vmatmul.bf16.gmra.mxu0 %v323
    %v866 = vpop.f32.mrf.mxu0
    %v867 = vadd.f32 %v778, %v866
    %v868 = vpop.f32.mrf.mxu0
    %v869 = vadd.f32 %v780, %v868
    %870 = vmatmul.bf16.gmra.mxu0 %v326
    %v871 = vpop.f32.mrf.mxu0
    %v872 = vadd.f32 %v783, %v871
    %v873 = vpop.f32.mrf.mxu0
    %v874 = vadd.f32 %v785, %v873
    %875 = vmatmul.bf16.gmra.mxu0 %v329
    %v876 = vpop.f32.mrf.mxu0
    %v877 = vadd.f32 %v788, %v876
    %v878 = vpop.f32.mrf.mxu0
    %v879 = vadd.f32 %v790, %v878
    %880 = vmatmul.bf16.gmra.mxu0 %v332
    %v881 = vpop.f32.mrf.mxu0
    %v882 = vadd.f32 %v793, %v881
    %v883 = vpop.f32.mrf.mxu0
    %v884 = vadd.f32 %v795, %v883
    %885 = vmatmul.bf16.gmra.mxu0 %v335
    %v886 = vpop.f32.mrf.mxu0
    %v887 = vadd.f32 %v798, %v886
    %v888 = vpop.f32.mrf.mxu0
    %v889 = vadd.f32 %v800, %v888
    %890 = vdwg.mxu0
    %891 = vmatpush.bf16.msra.mxu0 %v543
    %892 = vmatpush.bf16.msra.mxu0 %v541
    %893 = vmatpush.bf16.msra.mxu0 %v539
    %894 = vmatpush.bf16.msra.mxu0 %v537
    %895 = vmatpush.bf16.msra.mxu0 %v535
    %896 = vmatpush.bf16.msra.mxu0 %v533
    %897 = vmatpush.bf16.msra.mxu0 %v531
    %898 = vmatpush.bf16.msra.mxu0 %v529
    %899 = vmatmul.bf16.gmra.mxu0 %v288
    %v900 = vpop.f32.mrf.mxu0
    %v901 = vadd.f32 0.0, %v900
    %v902 = vpop.f32.mrf.mxu0
    %v903 = vadd.f32 0.0, %v902
    %904 = vmatmul.bf16.gmra.mxu0 %v291
    %v905 = vpop.f32.mrf.mxu0
    %v906 = vadd.f32 0.0, %v905
    %v907 = vpop.f32.mrf.mxu0
    %v908 = vadd.f32 0.0, %v907
    %909 = vmatmul.bf16.gmra.mxu0 %v294
    %v910 = vpop.f32.mrf.mxu0
    %v911 = vadd.f32 0.0, %v910
    %v912 = vpop.f32.mrf.mxu0
    %v913 = vadd.f32 0.0, %v912
    %914 = vmatmul.bf16.gmra.mxu0 %v297
    %v915 = vpop.f32.mrf.mxu0
    %v916 = vadd.f32 0.0, %v915
    %v917 = vpop.f32.mrf.mxu0
    %v918 = vadd.f32 0.0, %v917
    %919 = vmatmul.bf16.gmra.mxu0 %v300
    %v920 = vpop.f32.mrf.mxu0
    %v921 = vadd.f32 0.0, %v920
    %v922 = vpop.f32.mrf.mxu0
    %v923 = vadd.f32 0.0, %v922
    %924 = vmatmul.bf16.gmra.mxu0 %v303
    %v925 = vpop.f32.mrf.mxu0
    %v926 = vadd.f32 0.0, %v925
    %v927 = vpop.f32.mrf.mxu0
    %v928 = vadd.f32 0.0, %v927
    %929 = vmatmul.bf16.gmra.mxu0 %v306
    %v930 = vpop.f32.mrf.mxu0
    %v931 = vadd.f32 0.0, %v930
    %v932 = vpop.f32.mrf.mxu0
    %v933 = vadd.f32 0.0, %v932
    %934 = vmatmul.bf16.gmra.mxu0 %v309
    %v935 = vpop.f32.mrf.mxu0
    %v936 = vadd.f32 0.0, %v935
    %v937 = vpop.f32.mrf.mxu0
    %v938 = vadd.f32 0.0, %v937
    %939 = vmatmul.bf16.gmra.mxu0 %v312
    %v940 = vpop.f32.mrf.mxu0
    %v941 = vadd.f32 0.0, %v940
    %v942 = vpop.f32.mrf.mxu0
    %v943 = vadd.f32 0.0, %v942
    %944 = vmatmul.bf16.gmra.mxu0 %v315
    %v945 = vpop.f32.mrf.mxu0
    %v946 = vadd.f32 0.0, %v945
    %v947 = vpop.f32.mrf.mxu0
    %v948 = vadd.f32 0.0, %v947
    %949 = vmatmul.bf16.gmra.mxu0 %v318
    %v950 = vpop.f32.mrf.mxu0
    %v951 = vadd.f32 0.0, %v950
    %v952 = vpop.f32.mrf.mxu0
    %v953 = vadd.f32 0.0, %v952
    %954 = vmatmul.bf16.gmra.mxu0 %v321
    %v955 = vpop.f32.mrf.mxu0
    %v956 = vadd.f32 0.0, %v955
    %v957 = vpop.f32.mrf.mxu0
    %v958 = vadd.f32 0.0, %v957
    %959 = vmatmul.bf16.gmra.mxu0 %v324
    %v960 = vpop.f32.mrf.mxu0
    %v961 = vadd.f32 0.0, %v960
    %v962 = vpop.f32.mrf.mxu0
    %v963 = vadd.f32 0.0, %v962
    %964 = vmatmul.bf16.gmra.mxu0 %v327
    %v965 = vpop.f32.mrf.mxu0
    %v966 = vadd.f32 0.0, %v965
    %v967 = vpop.f32.mrf.mxu0
    %v968 = vadd.f32 0.0, %v967
    %969 = vmatmul.bf16.gmra.mxu0 %v330
    %v970 = vpop.f32.mrf.mxu0
    %v971 = vadd.f32 0.0, %v970
    %v972 = vpop.f32.mrf.mxu0
    %v973 = vadd.f32 0.0, %v972
    %974 = vmatmul.bf16.gmra.mxu0 %v333
    %v975 = vpop.f32.mrf.mxu0
    %v976 = vadd.f32 0.0, %v975
    %v977 = vpop.f32.mrf.mxu0
    %v978 = vadd.f32 0.0, %v977
    %979 = vdwg.mxu0
    %980 = vmatpush.bf16.msra.mxu0 %v559
    %981 = vmatpush.bf16.msra.mxu0 %v557
    %982 = vmatpush.bf16.msra.mxu0 %v555
    %983 = vmatpush.bf16.msra.mxu0 %v553
    %984 = vmatpush.bf16.msra.mxu0 %v551
    %985 = vmatpush.bf16.msra.mxu0 %v549
    %986 = vmatpush.bf16.msra.mxu0 %v547
    %987 = vmatpush.bf16.msra.mxu0 %v545
    %988 = vmatmul.bf16.gmra.mxu0 %v289
    %v989 = vpop.f32.mrf.mxu0
    %v990 = vadd.f32 %v901, %v989
    %v991 = vpop.f32.mrf.mxu0
    %v992 = vadd.f32 %v903, %v991
    %993 = vmatmul.bf16.gmra.mxu0 %v292
    %v994 = vpop.f32.mrf.mxu0
    %v995 = vadd.f32 %v906, %v994
    %v996 = vpop.f32.mrf.mxu0
    %v997 = vadd.f32 %v908, %v996
    %998 = vmatmul.bf16.gmra.mxu0 %v295
    %v999 = vpop.f32.mrf.mxu0
    %v1000 = vadd.f32 %v911, %v999
    %v1001 = vpop.f32.mrf.mxu0
    %v1002 = vadd.f32 %v913, %v1001
    %1003 = vmatmul.bf16.gmra.mxu0 %v298
    %v1004 = vpop.f32.mrf.mxu0
    %v1005 = vadd.f32 %v916, %v1004
    %v1006 = vpop.f32.mrf.mxu0
    %v1007 = vadd.f32 %v918, %v1006
    %1008 = vmatmul.bf16.gmra.mxu0 %v301
    %v1009 = vpop.f32.mrf.mxu0
    %v1010 = vadd.f32 %v921, %v1009
    %v1011 = vpop.f32.mrf.mxu0
    %v1012 = vadd.f32 %v923, %v1011
    %1013 = vmatmul.bf16.gmra.mxu0 %v304
    %v1014 = vpop.f32.mrf.mxu0
    %v1015 = vadd.f32 %v926, %v1014
    %v1016 = vpop.f32.mrf.mxu0
    %v1017 = vadd.f32 %v928, %v1016
    %1018 = vmatmul.bf16.gmra.mxu0 %v307
    %v1019 = vpop.f32.mrf.mxu0
    %v1020 = vadd.f32 %v931, %v1019
    %v1021 = vpop.f32.mrf.mxu0
    %v1022 = vadd.f32 %v933, %v1021
    %1023 = vmatmul.bf16.gmra.mxu0 %v310
    %v1024 = vpop.f32.mrf.mxu0
    %v1025 = vadd.f32 %v936, %v1024
    %v1026 = vpop.f32.mrf.mxu0
    %v1027 = vadd.f32 %v938, %v1026
    %1028 = vmatmul.bf16.gmra.mxu0 %v313
    %v1029 = vpop.f32.mrf.mxu0
    %v1030 = vadd.f32 %v941, %v1029
    %v1031 = vpop.f32.mrf.mxu0
    %v1032 = vadd.f32 %v943, %v1031
    %1033 = vmatmul.bf16.gmra.mxu0 %v316
    %v1034 = vpop.f32.mrf.mxu0
    %v1035 = vadd.f32 %v946, %v1034
    %v1036 = vpop.f32.mrf.mxu0
    %v1037 = vadd.f32 %v948, %v1036
    %1038 = vmatmul.bf16.gmra.mxu0 %v319
    %v1039 = vpop.f32.mrf.mxu0
    %v1040 = vadd.f32 %v951, %v1039
    %v1041 = vpop.f32.mrf.mxu0
    %v1042 = vadd.f32 %v953, %v1041
    %1043 = vmatmul.bf16.gmra.mxu0 %v322
    %v1044 = vpop.f32.mrf.mxu0
    %v1045 = vadd.f32 %v956, %v1044
    %v1046 = vpop.f32.mrf.mxu0
    %v1047 = vadd.f32 %v958, %v1046
    %1048 = vmatmul.bf16.gmra.mxu0 %v325
    %v1049 = vpop.f32.mrf.mxu0
    %v1050 = vadd.f32 %v961, %v1049
    %v1051 = vpop.f32.mrf.mxu0
    %v1052 = vadd.f32 %v963, %v1051
    %1053 = vmatmul.bf16.gmra.mxu0 %v328
    %v1054 = vpop.f32.mrf.mxu0
    %v1055 = vadd.f32 %v966, %v1054
    %v1056 = vpop.f32.mrf.mxu0
    %v1057 = vadd.f32 %v968, %v1056
    %1058 = vmatmul.bf16.gmra.mxu0 %v331
    %v1059 = vpop.f32.mrf.mxu0
    %v1060 = vadd.f32 %v971, %v1059
    %v1061 = vpop.f32.mrf.mxu0
    %v1062 = vadd.f32 %v973, %v1061
    %1063 = vmatmul.bf16.gmra.mxu0 %v334
    %v1064 = vpop.f32.mrf.mxu0
    %v1065 = vadd.f32 %v976, %v1064
    %v1066 = vpop.f32.mrf.mxu0
    %v1067 = vadd.f32 %v978, %v1066
    %1068 = vdwg.mxu0
    %1069 = vmatpush.bf16.msra.mxu0 %v575
    %1070 = vmatpush.bf16.msra.mxu0 %v573
    %1071 = vmatpush.bf16.msra.mxu0 %v571
    %1072 = vmatpush.bf16.msra.mxu0 %v569
    %1073 = vmatpush.bf16.msra.mxu0 %v567
    %1074 = vmatpush.bf16.msra.mxu0 %v565
    %1075 = vmatpush.bf16.msra.mxu0 %v563
    %1076 = vmatpush.bf16.msra.mxu0 %v561
    %1077 = vmatmul.bf16.gmra.mxu0 %v290
    %v1078 = vpop.f32.mrf.mxu0
    %v1079 = vadd.f32 %v990, %v1078
    %v1080 = vpop.f32.mrf.mxu0
    %v1081 = vadd.f32 %v992, %v1080
    %1082 = vmatmul.bf16.gmra.mxu0 %v293
    %v1083 = vpop.f32.mrf.mxu0
    %v1084 = vadd.f32 %v995, %v1083
    %v1085 = vpop.f32.mrf.mxu0
    %v1086 = vadd.f32 %v997, %v1085
    %1087 = vmatmul.bf16.gmra.mxu0 %v296
    %v1088 = vpop.f32.mrf.mxu0
    %v1089 = vadd.f32 %v1000, %v1088
    %v1090 = vpop.f32.mrf.mxu0
    %v1091 = vadd.f32 %v1002, %v1090
    %1092 = vmatmul.bf16.gmra.mxu0 %v299
    %v1093 = vpop.f32.mrf.mxu0
    %v1094 = vadd.f32 %v1005, %v1093
    %v1095 = vpop.f32.mrf.mxu0
    %v1096 = vadd.f32 %v1007, %v1095
    %1097 = vmatmul.bf16.gmra.mxu0 %v302
    %v1098 = vpop.f32.mrf.mxu0
    %v1099 = vadd.f32 %v1010, %v1098
    %v1100 = vpop.f32.mrf.mxu0
    %v1101 = vadd.f32 %v1012, %v1100
    %1102 = vmatmul.bf16.gmra.mxu0 %v305
    %v1103 = vpop.f32.mrf.mxu0
    %v1104 = vadd.f32 %v1015, %v1103
    %v1105 = vpop.f32.mrf.mxu0
    %v1106 = vadd.f32 %v1017, %v1105
    %1107 = vmatmul.bf16.gmra.mxu0 %v308
    %v1108 = vpop.f32.mrf.mxu0
    %v1109 = vadd.f32 %v1020, %v1108
    %v1110 = vpop.f32.mrf.mxu0
    %v1111 = vadd.f32 %v1022, %v1110
    %1112 = vmatmul.bf16.gmra.mxu0 %v311
    %v1113 = vpop.f32.mrf.mxu0
    %v1114 = vadd.f32 %v1025, %v1113
    %v1115 = vpop.f32.mrf.mxu0
    %v1116 = vadd.f32 %v1027, %v1115
    %1117 = vmatmul.bf16.gmra.mxu0 %v314
    %v1118 = vpop.f32.mrf.mxu0
    %v1119 = vadd.f32 %v1030, %v1118
    %v1120 = vpop.f32.mrf.mxu0
    %v1121 = vadd.f32 %v1032, %v1120
    %1122 = vmatmul.bf16.gmra.mxu0 %v317
    %v1123 = vpop.f32.mrf.mxu0
    %v1124 = vadd.f32 %v1035, %v1123
    %v1125 = vpop.f32.mrf.mxu0
    %v1126 = vadd.f32 %v1037, %v1125
    %1127 = vmatmul.bf16.gmra.mxu0 %v320
    %v1128 = vpop.f32.mrf.mxu0
    %v1129 = vadd.f32 %v1040, %v1128
    %v1130 = vpop.f32.mrf.mxu0
    %v1131 = vadd.f32 %v1042, %v1130
    %1132 = vmatmul.bf16.gmra.mxu0 %v323
    %v1133 = vpop.f32.mrf.mxu0
    %v1134 = vadd.f32 %v1045, %v1133
    %v1135 = vpop.f32.mrf.mxu0
    %v1136 = vadd.f32 %v1047, %v1135
    %1137 = vmatmul.bf16.gmra.mxu0 %v326
    %v1138 = vpop.f32.mrf.mxu0
    %v1139 = vadd.f32 %v1050, %v1138
    %v1140 = vpop.f32.mrf.mxu0
    %v1141 = vadd.f32 %v1052, %v1140
    %1142 = vmatmul.bf16.gmra.mxu0 %v329
    %v1143 = vpop.f32.mrf.mxu0
    %v1144 = vadd.f32 %v1055, %v1143
    %v1145 = vpop.f32.mrf.mxu0
    %v1146 = vadd.f32 %v1057, %v1145
    %1147 = vmatmul.bf16.gmra.mxu0 %v332
    %v1148 = vpop.f32.mrf.mxu0
    %v1149 = vadd.f32 %v1060, %v1148
    %v1150 = vpop.f32.mrf.mxu0
    %v1151 = vadd.f32 %v1062, %v1150
    %1152 = vmatmul.bf16.gmra.mxu0 %v335
    %v1153 = vpop.f32.mrf.mxu0
    %v1154 = vadd.f32 %v1065, %v1153
    %v1155 = vpop.f32.mrf.mxu0
    %v1156 = vadd.f32 %v1067, %v1155
    %1157 = vdwg.mxu0
    %1158 = vst [vmem:[#allocation2] sm:$0xff] %v812
    %vm1159 = vcmask 523264
    %1160 = vst.msk [vmem:[#allocation2 + $0x8] sm:$0xff] %vm1159, %v1079
    %1161 = vst [vmem:[#allocation2 + $0x10] sm:$0xff] %v814
    %1162 = vst.msk [vmem:[#allocation2 + $0x18] sm:$0xff] %vm1159, %v1081
    %1163 = vst [vmem:[#allocation2 + $0x20] sm:$0xff] %v817
    %1164 = vst.msk [vmem:[#allocation2 + $0x28] sm:$0xff] %vm1159, %v1084
    %1165 = vst [vmem:[#allocation2 + $0x30] sm:$0xff] %v819
    %1166 = vst.msk [vmem:[#allocation2 + $0x38] sm:$0xff] %vm1159, %v1086
    %1167 = vst [vmem:[#allocation2 + $0x40] sm:$0xff] %v822
    %1168 = vst.msk [vmem:[#allocation2 + $0x48] sm:$0xff] %vm1159, %v1089
    %1169 = vst [vmem:[#allocation2 + $0x50] sm:$0xff] %v824
    %1170 = vst.msk [vmem:[#allocation2 + $0x58] sm:$0xff] %vm1159, %v1091
    %1171 = vst [vmem:[#allocation2 + $0x60] sm:$0xff] %v827
    %1172 = vst.msk [vmem:[#allocation2 + $0x68] sm:$0xff] %vm1159, %v1094
    %1173 = vst [vmem:[#allocation2 + $0x70] sm:$0xff] %v829
    %1174 = vst.msk [vmem:[#allocation2 + $0x78] sm:$0xff] %vm1159, %v1096
    %1175 = vst [vmem:[#allocation2 + $0x80] sm:$0xff] %v832
    %1176 = vst.msk [vmem:[#allocation2 + $0x88] sm:$0xff] %vm1159, %v1099
    %1177 = vst [vmem:[#allocation2 + $0x90] sm:$0xff] %v834
    %1178 = vst.msk [vmem:[#allocation2 + $0x98] sm:$0xff] %vm1159, %v1101
    %1179 = vst [vmem:[#allocation2 + $0xa0] sm:$0xff] %v837
    %1180 = vst.msk [vmem:[#allocation2 + $0xa8] sm:$0xff] %vm1159, %v1104
    %1181 = vst [vmem:[#allocation2 + $0xb0] sm:$0xff] %v839
    %1182 = vst.msk [vmem:[#allocation2 + $0xb8] sm:$0xff] %vm1159, %v1106
    %1183 = vst [vmem:[#allocation2 + $0xc0] sm:$0xff] %v842
    %1184 = vst.msk [vmem:[#allocation2 + $0xc8] sm:$0xff] %vm1159, %v1109
    %1185 = vst [vmem:[#allocation2 + $0xd0] sm:$0xff] %v844
    %1186 = vst.msk [vmem:[#allocation2 + $0xd8] sm:$0xff] %vm1159, %v1111
    %1187 = vst [vmem:[#allocation2 + $0xe0] sm:$0xff] %v847
    %1188 = vst.msk [vmem:[#allocation2 + $0xe8] sm:$0xff] %vm1159, %v1114
    %1189 = vst [vmem:[#allocation2 + $0xf0] sm:$0xff] %v849
    %1190 = vst.msk [vmem:[#allocation2 + $0xf8] sm:$0xff] %vm1159, %v1116
    %1191 = vst [vmem:[#allocation2 + $0x100] sm:$0xff] %v852
    %1192 = vst.msk [vmem:[#allocation2 + $0x108] sm:$0xff] %vm1159, %v1119
    %1193 = vst [vmem:[#allocation2 + $0x110] sm:$0xff] %v854
    %1194 = vst.msk [vmem:[#allocation2 + $0x118] sm:$0xff] %vm1159, %v1121
    %1195 = vst [vmem:[#allocation2 + $0x120] sm:$0xff] %v857
    %1196 = vst.msk [vmem:[#allocation2 + $0x128] sm:$0xff] %vm1159, %v1124
    %1197 = vst [vmem:[#allocation2 + $0x130] sm:$0xff] %v859
    %1198 = vst.msk [vmem:[#allocation2 + $0x138] sm:$0xff] %vm1159, %v1126
    %1199 = vst [vmem:[#allocation2 + $0x140] sm:$0xff] %v862
    %1200 = vst.msk [vmem:[#allocation2 + $0x148] sm:$0xff] %vm1159, %v1129
    %1201 = vst [vmem:[#allocation2 + $0x150] sm:$0xff] %v864
    %1202 = vst.msk [vmem:[#allocation2 + $0x158] sm:$0xff] %vm1159, %v1131
    %1203 = vst [vmem:[#allocation2 + $0x160] sm:$0xff] %v867
    %1204 = vst.msk [vmem:[#allocation2 + $0x168] sm:$0xff] %vm1159, %v1134
    %1205 = vst [vmem:[#allocation2 + $0x170] sm:$0xff] %v869
    %1206 = vst.msk [vmem:[#allocation2 + $0x178] sm:$0xff] %vm1159, %v1136
    %1207 = vst [vmem:[#allocation2 + $0x180] sm:$0xff] %v872
    %1208 = vst.msk [vmem:[#allocation2 + $0x188] sm:$0xff] %vm1159, %v1139
    %1209 = vst [vmem:[#allocation2 + $0x190] sm:$0xff] %v874
    %1210 = vst.msk [vmem:[#allocation2 + $0x198] sm:$0xff] %vm1159, %v1141
    %1211 = vst [vmem:[#allocation2 + $0x1a0] sm:$0xff] %v877
    %1212 = vst.msk [vmem:[#allocation2 + $0x1a8] sm:$0xff] %vm1159, %v1144
    %1213 = vst [vmem:[#allocation2 + $0x1b0] sm:$0xff] %v879
    %1214 = vst.msk [vmem:[#allocation2 + $0x1b8] sm:$0xff] %vm1159, %v1146
    %1215 = vst [vmem:[#allocation2 + $0x1c0] sm:$0xff] %v882
    %1216 = vst.msk [vmem:[#allocation2 + $0x1c8] sm:$0xff] %vm1159, %v1149
    %1217 = vst [vmem:[#allocation2 + $0x1d0] sm:$0xff] %v884
    %1218 = vst.msk [vmem:[#allocation2 + $0x1d8] sm:$0xff] %vm1159, %v1151
    %1219 = vst [vmem:[#allocation2 + $0x1e0] sm:$0xff] %v887
    %1220 = vst.msk [vmem:[#allocation2 + $0x1e8] sm:$0xff] %vm1159, %v1154
    %1221 = vst [vmem:[#allocation2 + $0x1f0] sm:$0xff] %v889
    %1222 = vst.msk [vmem:[#allocation2 + $0x1f8] sm:$0xff] %vm1159, %v1156
    %v1223 = vld [vmem:[#allocation2] sm:$0xff]
    %v1224 = vld [vmem:[#allocation2 + $0x10] sm:$0xff]
    %v1225 = vld [vmem:[#allocation2 + $0x20] sm:$0xff]
    %v1226 = vld [vmem:[#allocation2 + $0x30] sm:$0xff]
    %v1227 = vld [vmem:[#allocation2 + $0x40] sm:$0xff]
    %v1228 = vld [vmem:[#allocation2 + $0x50] sm:$0xff]
    %v1229 = vld [vmem:[#allocation2 + $0x60] sm:$0xff]
    %v1230 = vld [vmem:[#allocation2 + $0x70] sm:$0xff]
    %v1231 = vld [vmem:[#allocation2 + $0x80] sm:$0xff]
    %v1232 = vld [vmem:[#allocation2 + $0x90] sm:$0xff]
    %v1233 = vld [vmem:[#allocation2 + $0xa0] sm:$0xff]
    %v1234 = vld [vmem:[#allocation2 + $0xb0] sm:$0xff]
    %v1235 = vld [vmem:[#allocation2 + $0xc0] sm:$0xff]
    %v1236 = vld [vmem:[#allocation2 + $0xd0] sm:$0xff]
    %v1237 = vld [vmem:[#allocation2 + $0xe0] sm:$0xff]
    %v1238 = vld [vmem:[#allocation2 + $0xf0] sm:$0xff]
    %v1239 = vld [vmem:[#allocation2 + $0x100] sm:$0xff]
    %v1240 = vld [vmem:[#allocation2 + $0x110] sm:$0xff]
    %v1241 = vld [vmem:[#allocation2 + $0x120] sm:$0xff]
    %v1242 = vld [vmem:[#allocation2 + $0x130] sm:$0xff]
    %v1243 = vld [vmem:[#allocation2 + $0x140] sm:$0xff]
    %v1244 = vld [vmem:[#allocation2 + $0x150] sm:$0xff]
    %v1245 = vld [vmem:[#allocation2 + $0x160] sm:$0xff]
    %v1246 = vld [vmem:[#allocation2 + $0x170] sm:$0xff]
    %v1247 = vld [vmem:[#allocation2 + $0x180] sm:$0xff]
    %v1248 = vld [vmem:[#allocation2 + $0x190] sm:$0xff]
    %v1249 = vld [vmem:[#allocation2 + $0x1a0] sm:$0xff]
    %v1250 = vld [vmem:[#allocation2 + $0x1b0] sm:$0xff]
    %v1251 = vld [vmem:[#allocation2 + $0x1c0] sm:$0xff]
    %v1252 = vld [vmem:[#allocation2 + $0x1d0] sm:$0xff]
    %v1253 = vld [vmem:[#allocation2 + $0x1e0] sm:$0xff]
    %v1254 = vld [vmem:[#allocation2 + $0x1f0] sm:$0xff]
    %v1255 = vpack.c.bf16 %v1223, %v1223
    %v1256 = vpack.c.bf16 %v1224, %v1224
    %v1257 = vpack.c.bf16 %v1225, %v1225
    %v1258 = vpack.c.bf16 %v1226, %v1226
    %v1259 = vpack.c.bf16 %v1227, %v1227
    %v1260 = vpack.c.bf16 %v1228, %v1228
    %v1261 = vpack.c.bf16 %v1229, %v1229
    %v1262 = vpack.c.bf16 %v1230, %v1230
    %v1263 = vpack.c.bf16 %v1231, %v1231
    %v1264 = vpack.c.bf16 %v1232, %v1232
    %v1265 = vpack.c.bf16 %v1233, %v1233
    %v1266 = vpack.c.bf16 %v1234, %v1234
    %v1267 = vpack.c.bf16 %v1235, %v1235
    %v1268 = vpack.c.bf16 %v1236, %v1236
    %v1269 = vpack.c.bf16 %v1237, %v1237
    %v1270 = vpack.c.bf16 %v1238, %v1238
    %v1271 = vpack.c.bf16 %v1239, %v1239
    %v1272 = vpack.c.bf16 %v1240, %v1240
    %v1273 = vpack.c.bf16 %v1241, %v1241
    %v1274 = vpack.c.bf16 %v1242, %v1242
    %v1275 = vpack.c.bf16 %v1243, %v1243
    %v1276 = vpack.c.bf16 %v1244, %v1244
    %v1277 = vpack.c.bf16 %v1245, %v1245
    %v1278 = vpack.c.bf16 %v1246, %v1246
    %v1279 = vpack.c.bf16 %v1247, %v1247
    %v1280 = vpack.c.bf16 %v1248, %v1248
    %v1281 = vpack.c.bf16 %v1249, %v1249
    %v1282 = vpack.c.bf16 %v1250, %v1250
    %v1283 = vpack.c.bf16 %v1251, %v1251
    %v1284 = vpack.c.bf16 %v1252, %v1252
    %v1285 = vpack.c.bf16 %v1253, %v1253
    %v1286 = vpack.c.bf16 %v1254, %v1254
    %v1287 = vld [vmem:[#allocation2 + $0x8] sm:$0xff]
    %v1288 = vld [vmem:[#allocation2 + $0x18] sm:$0xff]
    %v1289 = vld [vmem:[#allocation2 + $0x28] sm:$0xff]
    %v1290 = vld [vmem:[#allocation2 + $0x38] sm:$0xff]
    %v1291 = vld [vmem:[#allocation2 + $0x48] sm:$0xff]
    %v1292 = vld [vmem:[#allocation2 + $0x58] sm:$0xff]
    %v1293 = vld [vmem:[#allocation2 + $0x68] sm:$0xff]
    %v1294 = vld [vmem:[#allocation2 + $0x78] sm:$0xff]
    %v1295 = vld [vmem:[#allocation2 + $0x88] sm:$0xff]
    %v1296 = vld [vmem:[#allocation2 + $0x98] sm:$0xff]
    %v1297 = vld [vmem:[#allocation2 + $0xa8] sm:$0xff]
    %v1298 = vld [vmem:[#allocation2 + $0xb8] sm:$0xff]
    %v1299 = vld [vmem:[#allocation2 + $0xc8] sm:$0xff]
    %v1300 = vld [vmem:[#allocation2 + $0xd8] sm:$0xff]
    %v1301 = vld [vmem:[#allocation2 + $0xe8] sm:$0xff]
    %v1302 = vld [vmem:[#allocation2 + $0xf8] sm:$0xff]
    %v1303 = vld [vmem:[#allocation2 + $0x108] sm:$0xff]
    %v1304 = vld [vmem:[#allocation2 + $0x118] sm:$0xff]
    %v1305 = vld [vmem:[#allocation2 + $0x128] sm:$0xff]
    %v1306 = vld [vmem:[#allocation2 + $0x138] sm:$0xff]
    %v1307 = vld [vmem:[#allocation2 + $0x148] sm:$0xff]
    %v1308 = vld [vmem:[#allocation2 + $0x158] sm:$0xff]
    %v1309 = vld [vmem:[#allocation2 + $0x168] sm:$0xff]
    %v1310 = vld [vmem:[#allocation2 + $0x178] sm:$0xff]
    %v1311 = vld [vmem:[#allocation2 + $0x188] sm:$0xff]
    %v1312 = vld [vmem:[#allocation2 + $0x198] sm:$0xff]
    %v1313 = vld [vmem:[#allocation2 + $0x1a8] sm:$0xff]
    %v1314 = vld [vmem:[#allocation2 + $0x1b8] sm:$0xff]
    %v1315 = vld [vmem:[#allocation2 + $0x1c8] sm:$0xff]
    %v1316 = vld [vmem:[#allocation2 + $0x1d8] sm:$0xff]
    %v1317 = vld [vmem:[#allocation2 + $0x1e8] sm:$0xff]
    %v1318 = vld [vmem:[#allocation2 + $0x1f8] sm:$0xff]
    %v1319 = vpack.c.bf16 %v1287, %v1287
    %v1320 = vpack.c.bf16 %v1288, %v1288
    %v1321 = vpack.c.bf16 %v1289, %v1289
    %v1322 = vpack.c.bf16 %v1290, %v1290
    %v1323 = vpack.c.bf16 %v1291, %v1291
    %v1324 = vpack.c.bf16 %v1292, %v1292
    %v1325 = vpack.c.bf16 %v1293, %v1293
    %v1326 = vpack.c.bf16 %v1294, %v1294
    %v1327 = vpack.c.bf16 %v1295, %v1295
    %v1328 = vpack.c.bf16 %v1296, %v1296
    %v1329 = vpack.c.bf16 %v1297, %v1297
    %v1330 = vpack.c.bf16 %v1298, %v1298
    %v1331 = vpack.c.bf16 %v1299, %v1299
    %v1332 = vpack.c.bf16 %v1300, %v1300
    %v1333 = vpack.c.bf16 %v1301, %v1301
    %v1334 = vpack.c.bf16 %v1302, %v1302
    %v1335 = vpack.c.bf16 %v1303, %v1303
    %v1336 = vpack.c.bf16 %v1304, %v1304
    %v1337 = vpack.c.bf16 %v1305, %v1305
    %v1338 = vpack.c.bf16 %v1306, %v1306
    %v1339 = vpack.c.bf16 %v1307, %v1307
    %v1340 = vpack.c.bf16 %v1308, %v1308
    %v1341 = vpack.c.bf16 %v1309, %v1309
    %v1342 = vpack.c.bf16 %v1310, %v1310
    %v1343 = vpack.c.bf16 %v1311, %v1311
    %v1344 = vpack.c.bf16 %v1312, %v1312
    %v1345 = vpack.c.bf16 %v1313, %v1313
    %v1346 = vpack.c.bf16 %v1314, %v1314
    %v1347 = vpack.c.bf16 %v1315, %v1315
    %v1348 = vpack.c.bf16 %v1316, %v1316
    %v1349 = vpack.c.bf16 %v1317, %v1317
    %v1350 = vpack.c.bf16 %v1318, %v1318
    %v1351 = vld [vmem:[%s2] sm:$0xff]
    %v1352 = vld [vmem:[%s2 + $0x8] sm:$0xff]
    %v1353 = vld [vmem:[%s2 + $0x10] sm:$0xff]
    %v1354 = vld [vmem:[%s2 + $0x18] sm:$0xff]
    %v1355 = vld [vmem:[%s2 + $0x20] sm:$0xff]
    %v1356 = vld [vmem:[%s2 + $0x28] sm:$0xff]
    %v1357 = vld [vmem:[%s2 + $0x30] sm:$0xff]
    %v1358 = vld [vmem:[%s2 + $0x38] sm:$0xff]
    %v1367 = vunpack.c.l.b16 %v1255
    %v1368 = vunpack.c.l.b16 %v1256
    %v1369 = vunpack.c.l.b16 %v1257
    %v1370 = vunpack.c.l.b16 %v1258
    %v1371 = vunpack.c.l.b16 %v1259
    %v1372 = vunpack.c.l.b16 %v1260
    %v1373 = vunpack.c.l.b16 %v1261
    %v1374 = vunpack.c.l.b16 %v1262
    %v1375 = vpack.c.b16 %v1368, %v1367
    %v1376 = vpack.c.b16 %v1370, %v1369
    %v1377 = vpack.c.b16 %v1372, %v1371
    %v1378 = vpack.c.b16 %v1374, %v1373
    %1379 = vrot.lane.b32.xlu0 %v1375, 64
    %v1380 = vpop.permute.xlu0 %1379
    %1381 = vrot.lane.b32.xlu0 %v1376, 64
    %v1382 = vpop.permute.xlu0 %1381
    %1383 = vrot.lane.b32.xlu0 %v1377, 64
    %v1384 = vpop.permute.xlu0 %1383
    %1385 = vrot.lane.b32.xlu0 %v1378, 64
    %v1386 = vpop.permute.xlu0 %1385
    %v1388 = vsel %vm1159, %v1375, 0
    %v1391 = vsel %vm1159, %v1376, 0
    %v1394 = vsel %vm1159, %v1377, 0
    %v1397 = vsel %vm1159, %v1378, 0
    %v1400 = vsel %vm1159, %v1380, 0
    %v1403 = vsel %vm1159, %v1382, 0
    %v1406 = vsel %vm1159, %v1384, 0
    %v1409 = vsel %vm1159, %v1386, 0
    %1411 = vmatpush.bf16.xpose.msra.mxu0 0
    %1412 = vmatpush.bf16.xpose.msra.mxu0 0
    %1413 = vmatpush.bf16.xpose.msra.mxu0 0
    %1414 = vmatpush.bf16.xpose.msra.mxu0 0
    %1415 = vmatpush.bf16.xpose.msra.mxu0 %v1409
    %1416 = vmatpush.bf16.xpose.msra.mxu0 %v1406
    %1417 = vmatpush.bf16.xpose.msra.mxu0 %v1403
    %1418 = vmatpush.bf16.xpose.msra.mxu0 %v1400
    %1419 = vmatmul.bf16.gmra.mxu0 %v1388
    %v1420 = vpop.f32.mrf.mxu0
    %v1421 = vadd.f32 %v1351, %v1420
    %v1422 = vpop.f32.mrf.mxu0
    %v1423 = vadd.f32 %v1352, %v1422
    %1424 = vmatmul.bf16.gmra.mxu0 %v1391
    %v1425 = vpop.f32.mrf.mxu0
    %v1426 = vadd.f32 %v1353, %v1425
    %v1427 = vpop.f32.mrf.mxu0
    %v1428 = vadd.f32 %v1354, %v1427
    %1429 = vmatmul.bf16.gmra.mxu0 %v1394
    %v1430 = vpop.f32.mrf.mxu0
    %v1431 = vadd.f32 %v1355, %v1430
    %v1432 = vpop.f32.mrf.mxu0
    %v1433 = vadd.f32 %v1356, %v1432
    %1434 = vmatmul.bf16.gmra.mxu0 %v1397
    %v1435 = vpop.f32.mrf.mxu0
    %v1436 = vadd.f32 %v1357, %v1435
    %v1437 = vpop.f32.mrf.mxu0
    %v1438 = vadd.f32 %v1358, %v1437
    %1439 = vdwg.mxu0
    %v1448 = vunpack.c.l.b16 %v1263
    %v1449 = vunpack.c.l.b16 %v1264
    %v1450 = vunpack.c.l.b16 %v1265
    %v1451 = vunpack.c.l.b16 %v1266
    %v1452 = vunpack.c.l.b16 %v1267
    %v1453 = vunpack.c.l.b16 %v1268
    %v1454 = vunpack.c.l.b16 %v1269
    %v1455 = vunpack.c.l.b16 %v1270
    %v1456 = vpack.c.b16 %v1449, %v1448
    %v1457 = vpack.c.b16 %v1451, %v1450
    %v1458 = vpack.c.b16 %v1453, %v1452
    %v1459 = vpack.c.b16 %v1455, %v1454
    %1460 = vrot.lane.b32.xlu0 %v1456, 64
    %v1461 = vpop.permute.xlu0 %1460
    %1462 = vrot.lane.b32.xlu0 %v1457, 64
    %v1463 = vpop.permute.xlu0 %1462
    %1464 = vrot.lane.b32.xlu0 %v1458, 64
    %v1465 = vpop.permute.xlu0 %1464
    %1466 = vrot.lane.b32.xlu0 %v1459, 64
    %v1467 = vpop.permute.xlu0 %1466
    %v1469 = vsel %vm1159, %v1456, 0
    %v1472 = vsel %vm1159, %v1457, 0
    %v1475 = vsel %vm1159, %v1458, 0
    %v1478 = vsel %vm1159, %v1459, 0
    %v1481 = vsel %vm1159, %v1461, 0
    %v1484 = vsel %vm1159, %v1463, 0
    %v1487 = vsel %vm1159, %v1465, 0
    %v1490 = vsel %vm1159, %v1467, 0
    %1492 = vmatpush.bf16.xpose.msra.mxu0 0
    %1493 = vmatpush.bf16.xpose.msra.mxu0 0
    %1494 = vmatpush.bf16.xpose.msra.mxu0 0
    %1495 = vmatpush.bf16.xpose.msra.mxu0 0
    %1496 = vmatpush.bf16.xpose.msra.mxu0 %v1490
    %1497 = vmatpush.bf16.xpose.msra.mxu0 %v1487
    %1498 = vmatpush.bf16.xpose.msra.mxu0 %v1484
    %1499 = vmatpush.bf16.xpose.msra.mxu0 %v1481
    %1500 = vmatmul.bf16.gmra.mxu0 %v1469
    %v1501 = vpop.f32.mrf.mxu0
    %v1502 = vadd.f32 %v1351, %v1501
    %v1503 = vpop.f32.mrf.mxu0
    %v1504 = vadd.f32 %v1352, %v1503
    %1505 = vmatmul.bf16.gmra.mxu0 %v1472
    %v1506 = vpop.f32.mrf.mxu0
    %v1507 = vadd.f32 %v1353, %v1506
    %v1508 = vpop.f32.mrf.mxu0
    %v1509 = vadd.f32 %v1354, %v1508
    %1510 = vmatmul.bf16.gmra.mxu0 %v1475
    %v1511 = vpop.f32.mrf.mxu0
    %v1512 = vadd.f32 %v1355, %v1511
    %v1513 = vpop.f32.mrf.mxu0
    %v1514 = vadd.f32 %v1356, %v1513
    %1515 = vmatmul.bf16.gmra.mxu0 %v1478
    %v1516 = vpop.f32.mrf.mxu0
    %v1517 = vadd.f32 %v1357, %v1516
    %v1518 = vpop.f32.mrf.mxu0
    %v1519 = vadd.f32 %v1358, %v1518
    %1520 = vdwg.mxu0
    %v1529 = vunpack.c.l.b16 %v1271
    %v1530 = vunpack.c.l.b16 %v1272
    %v1531 = vunpack.c.l.b16 %v1273
    %v1532 = vunpack.c.l.b16 %v1274
    %v1533 = vunpack.c.l.b16 %v1275
    %v1534 = vunpack.c.l.b16 %v1276
    %v1535 = vunpack.c.l.b16 %v1277
    %v1536 = vunpack.c.l.b16 %v1278
    %v1537 = vpack.c.b16 %v1530, %v1529
    %v1538 = vpack.c.b16 %v1532, %v1531
    %v1539 = vpack.c.b16 %v1534, %v1533
    %v1540 = vpack.c.b16 %v1536, %v1535
    %1541 = vrot.lane.b32.xlu0 %v1537, 64
    %v1542 = vpop.permute.xlu0 %1541
    %1543 = vrot.lane.b32.xlu0 %v1538, 64
    %v1544 = vpop.permute.xlu0 %1543
    %1545 = vrot.lane.b32.xlu0 %v1539, 64
    %v1546 = vpop.permute.xlu0 %1545
    %1547 = vrot.lane.b32.xlu0 %v1540, 64
    %v1548 = vpop.permute.xlu0 %1547
    %v1550 = vsel %vm1159, %v1537, 0
    %v1553 = vsel %vm1159, %v1538, 0
    %v1556 = vsel %vm1159, %v1539, 0
    %v1559 = vsel %vm1159, %v1540, 0
    %v1562 = vsel %vm1159, %v1542, 0
    %v1565 = vsel %vm1159, %v1544, 0
    %v1568 = vsel %vm1159, %v1546, 0
    %v1571 = vsel %vm1159, %v1548, 0
    %1573 = vmatpush.bf16.xpose.msra.mxu0 0
    %1574 = vmatpush.bf16.xpose.msra.mxu0 0
    %1575 = vmatpush.bf16.xpose.msra.mxu0 0
    %1576 = vmatpush.bf16.xpose.msra.mxu0 0
    %1577 = vmatpush.bf16.xpose.msra.mxu0 %v1571
    %1578 = vmatpush.bf16.xpose.msra.mxu0 %v1568
    %1579 = vmatpush.bf16.xpose.msra.mxu0 %v1565
    %1580 = vmatpush.bf16.xpose.msra.mxu0 %v1562
    %1581 = vmatmul.bf16.gmra.mxu0 %v1550
    %v1582 = vpop.f32.mrf.mxu0
    %v1583 = vadd.f32 %v1351, %v1582
    %v1584 = vpop.f32.mrf.mxu0
    %v1585 = vadd.f32 %v1352, %v1584
    %1586 = vmatmul.bf16.gmra.mxu0 %v1553
    %v1587 = vpop.f32.mrf.mxu0
    %v1588 = vadd.f32 %v1353, %v1587
    %v1589 = vpop.f32.mrf.mxu0
    %v1590 = vadd.f32 %v1354, %v1589
    %1591 = vmatmul.bf16.gmra.mxu0 %v1556
    %v1592 = vpop.f32.mrf.mxu0
    %v1593 = vadd.f32 %v1355, %v1592
    %v1594 = vpop.f32.mrf.mxu0
    %v1595 = vadd.f32 %v1356, %v1594
    %1596 = vmatmul.bf16.gmra.mxu0 %v1559
    %v1597 = vpop.f32.mrf.mxu0
    %v1598 = vadd.f32 %v1357, %v1597
    %v1599 = vpop.f32.mrf.mxu0
    %v1600 = vadd.f32 %v1358, %v1599
    %1601 = vdwg.mxu0
    %v1610 = vunpack.c.l.b16 %v1279
    %v1611 = vunpack.c.l.b16 %v1280
    %v1612 = vunpack.c.l.b16 %v1281
    %v1613 = vunpack.c.l.b16 %v1282
    %v1614 = vunpack.c.l.b16 %v1283
    %v1615 = vunpack.c.l.b16 %v1284
    %v1616 = vunpack.c.l.b16 %v1285
    %v1617 = vunpack.c.l.b16 %v1286
    %v1618 = vpack.c.b16 %v1611, %v1610
    %v1619 = vpack.c.b16 %v1613, %v1612
    %v1620 = vpack.c.b16 %v1615, %v1614
    %v1621 = vpack.c.b16 %v1617, %v1616
    %1622 = vrot.lane.b32.xlu0 %v1618, 64
    %v1623 = vpop.permute.xlu0 %1622
    %1624 = vrot.lane.b32.xlu0 %v1619, 64
    %v1625 = vpop.permute.xlu0 %1624
    %1626 = vrot.lane.b32.xlu0 %v1620, 64
    %v1627 = vpop.permute.xlu0 %1626
    %1628 = vrot.lane.b32.xlu0 %v1621, 64
    %v1629 = vpop.permute.xlu0 %1628
    %v1631 = vsel %vm1159, %v1618, 0
    %v1634 = vsel %vm1159, %v1619, 0
    %v1637 = vsel %vm1159, %v1620, 0
    %v1640 = vsel %vm1159, %v1621, 0
    %v1643 = vsel %vm1159, %v1623, 0
    %v1646 = vsel %vm1159, %v1625, 0
    %v1649 = vsel %vm1159, %v1627, 0
    %v1652 = vsel %vm1159, %v1629, 0
    %1654 = vmatpush.bf16.xpose.msra.mxu0 0
    %1655 = vmatpush.bf16.xpose.msra.mxu0 0
    %1656 = vmatpush.bf16.xpose.msra.mxu0 0
    %1657 = vmatpush.bf16.xpose.msra.mxu0 0
    %1658 = vmatpush.bf16.xpose.msra.mxu0 %v1652
    %1659 = vmatpush.bf16.xpose.msra.mxu0 %v1649
    %1660 = vmatpush.bf16.xpose.msra.mxu0 %v1646
    %1661 = vmatpush.bf16.xpose.msra.mxu0 %v1643
    %1662 = vmatmul.bf16.gmra.mxu0 %v1631
    %v1663 = vpop.f32.mrf.mxu0
    %v1664 = vadd.f32 %v1351, %v1663
    %v1665 = vpop.f32.mrf.mxu0
    %v1666 = vadd.f32 %v1352, %v1665
    %1667 = vmatmul.bf16.gmra.mxu0 %v1634
    %v1668 = vpop.f32.mrf.mxu0
    %v1669 = vadd.f32 %v1353, %v1668
    %v1670 = vpop.f32.mrf.mxu0
    %v1671 = vadd.f32 %v1354, %v1670
    %1672 = vmatmul.bf16.gmra.mxu0 %v1637
    %v1673 = vpop.f32.mrf.mxu0
    %v1674 = vadd.f32 %v1355, %v1673
    %v1675 = vpop.f32.mrf.mxu0
    %v1676 = vadd.f32 %v1356, %v1675
    %1677 = vmatmul.bf16.gmra.mxu0 %v1640
    %v1678 = vpop.f32.mrf.mxu0
    %v1679 = vadd.f32 %v1357, %v1678
    %v1680 = vpop.f32.mrf.mxu0
    %v1681 = vadd.f32 %v1358, %v1680
    %1682 = vdwg.mxu0
    %v1683 = vsel %vm1159, %v1421, -inf
    %1684 = vmax.xlane.f32.xlu0 %v1683
    %v1685 = vpop.xlane.xlu0 %1684
    %v1686 = vsel %vm1159, %v1423, -inf
    %1687 = vmax.xlane.f32.xlu0 %v1686
    %v1688 = vpop.xlane.xlu0 %1687
    %v1689 = vsel %vm1159, %v1426, -inf
    %1690 = vmax.xlane.f32.xlu0 %v1689
    %v1691 = vpop.xlane.xlu0 %1690
    %v1692 = vsel %vm1159, %v1428, -inf
    %1693 = vmax.xlane.f32.xlu0 %v1692
    %v1694 = vpop.xlane.xlu0 %1693
    %v1695 = vsel %vm1159, %v1431, -inf
    %1696 = vmax.xlane.f32.xlu0 %v1695
    %v1697 = vpop.xlane.xlu0 %1696
    %v1698 = vsel %vm1159, %v1433, -inf
    %1699 = vmax.xlane.f32.xlu0 %v1698
    %v1700 = vpop.xlane.xlu0 %1699
    %v1701 = vsel %vm1159, %v1436, -inf
    %1702 = vmax.xlane.f32.xlu0 %v1701
    %v1703 = vpop.xlane.xlu0 %1702
    %v1704 = vsel %vm1159, %v1438, -inf
    %1705 = vmax.xlane.f32.xlu0 %v1704
    %v1706 = vpop.xlane.xlu0 %1705
    %v1707 = vsel %vm1159, %v1502, -inf
    %1708 = vmax.xlane.f32.xlu0 %v1707
    %v1709 = vpop.xlane.xlu0 %1708
    %v1710 = vsel %vm1159, %v1504, -inf
    %1711 = vmax.xlane.f32.xlu0 %v1710
    %v1712 = vpop.xlane.xlu0 %1711
    %v1713 = vsel %vm1159, %v1507, -inf
    %1714 = vmax.xlane.f32.xlu0 %v1713
    %v1715 = vpop.xlane.xlu0 %1714
    %v1716 = vsel %vm1159, %v1509, -inf
    %1717 = vmax.xlane.f32.xlu0 %v1716
    %v1718 = vpop.xlane.xlu0 %1717
    %v1719 = vsel %vm1159, %v1512, -inf
    %1720 = vmax.xlane.f32.xlu0 %v1719
    %v1721 = vpop.xlane.xlu0 %1720
    %v1722 = vsel %vm1159, %v1514, -inf
    %1723 = vmax.xlane.f32.xlu0 %v1722
    %v1724 = vpop.xlane.xlu0 %1723
    %v1725 = vsel %vm1159, %v1517, -inf
    %1726 = vmax.xlane.f32.xlu0 %v1725
    %v1727 = vpop.xlane.xlu0 %1726
    %v1728 = vsel %vm1159, %v1519, -inf
    %1729 = vmax.xlane.f32.xlu0 %v1728
    %v1730 = vpop.xlane.xlu0 %1729
    %v1731 = vsel %vm1159, %v1583, -inf
    %1732 = vmax.xlane.f32.xlu0 %v1731
    %v1733 = vpop.xlane.xlu0 %1732
    %v1734 = vsel %vm1159, %v1585, -inf
    %1735 = vmax.xlane.f32.xlu0 %v1734
    %v1736 = vpop.xlane.xlu0 %1735
    %v1737 = vsel %vm1159, %v1588, -inf
    %1738 = vmax.xlane.f32.xlu0 %v1737
    %v1739 = vpop.xlane.xlu0 %1738
    %v1740 = vsel %vm1159, %v1590, -inf
    %1741 = vmax.xlane.f32.xlu0 %v1740
    %v1742 = vpop.xlane.xlu0 %1741
    %v1743 = vsel %vm1159, %v1593, -inf
    %1744 = vmax.xlane.f32.xlu0 %v1743
    %v1745 = vpop.xlane.xlu0 %1744
    %v1746 = vsel %vm1159, %v1595, -inf
    %1747 = vmax.xlane.f32.xlu0 %v1746
    %v1748 = vpop.xlane.xlu0 %1747
    %v1749 = vsel %vm1159, %v1598, -inf
    %1750 = vmax.xlane.f32.xlu0 %v1749
    %v1751 = vpop.xlane.xlu0 %1750
    %v1752 = vsel %vm1159, %v1600, -inf
    %1753 = vmax.xlane.f32.xlu0 %v1752
    %v1754 = vpop.xlane.xlu0 %1753
    %v1755 = vsel %vm1159, %v1664, -inf
    %1756 = vmax.xlane.f32.xlu0 %v1755
    %v1757 = vpop.xlane.xlu0 %1756
    %v1758 = vsel %vm1159, %v1666, -inf
    %1759 = vmax.xlane.f32.xlu0 %v1758
    %v1760 = vpop.xlane.xlu0 %1759
    %v1761 = vsel %vm1159, %v1669, -inf
    %1762 = vmax.xlane.f32.xlu0 %v1761
    %v1763 = vpop.xlane.xlu0 %1762
    %v1764 = vsel %vm1159, %v1671, -inf
    %1765 = vmax.xlane.f32.xlu0 %v1764
    %v1766 = vpop.xlane.xlu0 %1765
    %v1767 = vsel %vm1159, %v1674, -inf
    %1768 = vmax.xlane.f32.xlu0 %v1767
    %v1769 = vpop.xlane.xlu0 %1768
    %v1770 = vsel %vm1159, %v1676, -inf
    %1771 = vmax.xlane.f32.xlu0 %v1770
    %v1772 = vpop.xlane.xlu0 %1771
    %v1773 = vsel %vm1159, %v1679, -inf
    %1774 = vmax.xlane.f32.xlu0 %v1773
    %v1775 = vpop.xlane.xlu0 %1774
    %v1776 = vsel %vm1159, %v1681, -inf
    %1777 = vmax.xlane.f32.xlu0 %v1776
    %v1778 = vpop.xlane.xlu0 %1777
    %v1779 = vsub.f32 %v1421, %v1685
    %v1780 = vsub.f32 %v1423, %v1688
    %v1781 = vsub.f32 %v1426, %v1691
    %v1782 = vsub.f32 %v1428, %v1694
    %v1783 = vsub.f32 %v1431, %v1697
    %v1784 = vsub.f32 %v1433, %v1700
    %v1785 = vsub.f32 %v1436, %v1703
    %v1786 = vsub.f32 %v1438, %v1706
    %v1787 = vsub.f32 %v1502, %v1709
    %v1788 = vsub.f32 %v1504, %v1712
    %v1789 = vsub.f32 %v1507, %v1715
    %v1790 = vsub.f32 %v1509, %v1718
    %v1791 = vsub.f32 %v1512, %v1721
    %v1792 = vsub.f32 %v1514, %v1724
    %v1793 = vsub.f32 %v1517, %v1727
    %v1794 = vsub.f32 %v1519, %v1730
    %v1795 = vsub.f32 %v1583, %v1733
    %v1796 = vsub.f32 %v1585, %v1736
    %v1797 = vsub.f32 %v1588, %v1739
    %v1798 = vsub.f32 %v1590, %v1742
    %v1799 = vsub.f32 %v1593, %v1745
    %v1800 = vsub.f32 %v1595, %v1748
    %v1801 = vsub.f32 %v1598, %v1751
    %v1802 = vsub.f32 %v1600, %v1754
    %v1803 = vsub.f32 %v1664, %v1757
    %v1804 = vsub.f32 %v1666, %v1760
    %v1805 = vsub.f32 %v1669, %v1763
    %v1806 = vsub.f32 %v1671, %v1766
    %v1807 = vsub.f32 %v1674, %v1769
    %v1808 = vsub.f32 %v1676, %v1772
    %v1809 = vsub.f32 %v1679, %v1775
    %v1810 = vsub.f32 %v1681, %v1778
    %v1811 = vmul.f32 %v1779, 1.442695
    %v1812 = vpow.pop %v1811
    %v1813 = vmul.f32 %v1780, 1.442695
    %v1814 = vpow.pop %v1813
    %v1815 = vmul.f32 %v1781, 1.442695
    %v1816 = vpow.pop %v1815
    %v1817 = vmul.f32 %v1782, 1.442695
    %v1818 = vpow.pop %v1817
    %v1819 = vmul.f32 %v1783, 1.442695
    %v1820 = vpow.pop %v1819
    %v1821 = vmul.f32 %v1784, 1.442695
    %v1822 = vpow.pop %v1821
    %v1823 = vmul.f32 %v1785, 1.442695
    %v1824 = vpow.pop %v1823
    %v1825 = vmul.f32 %v1786, 1.442695
    %v1826 = vpow.pop %v1825
    %v1827 = vmul.f32 %v1787, 1.442695
    %v1828 = vpow.pop %v1827
    %v1829 = vmul.f32 %v1788, 1.442695
    %v1830 = vpow.pop %v1829
    %v1831 = vmul.f32 %v1789, 1.442695
    %v1832 = vpow.pop %v1831
    %v1833 = vmul.f32 %v1790, 1.442695
    %v1834 = vpow.pop %v1833
    %v1835 = vmul.f32 %v1791, 1.442695
    %v1836 = vpow.pop %v1835
    %v1837 = vmul.f32 %v1792, 1.442695
    %v1838 = vpow.pop %v1837
    %v1839 = vmul.f32 %v1793, 1.442695
    %v1840 = vpow.pop %v1839
    %v1841 = vmul.f32 %v1794, 1.442695
    %v1842 = vpow.pop %v1841
    %v1843 = vmul.f32 %v1795, 1.442695
    %v1844 = vpow.pop %v1843
    %v1845 = vmul.f32 %v1796, 1.442695
    %v1846 = vpow.pop %v1845
    %v1847 = vmul.f32 %v1797, 1.442695
    %v1848 = vpow.pop %v1847
    %v1849 = vmul.f32 %v1798, 1.442695
    %v1850 = vpow.pop %v1849
    %v1851 = vmul.f32 %v1799, 1.442695
    %v1852 = vpow.pop %v1851
    %v1853 = vmul.f32 %v1800, 1.442695
    %v1854 = vpow.pop %v1853
    %v1855 = vmul.f32 %v1801, 1.442695
    %v1856 = vpow.pop %v1855
    %v1857 = vmul.f32 %v1802, 1.442695
    %v1858 = vpow.pop %v1857
    %v1859 = vmul.f32 %v1803, 1.442695
    %v1860 = vpow.pop %v1859
    %v1861 = vmul.f32 %v1804, 1.442695
    %v1862 = vpow.pop %v1861
    %v1863 = vmul.f32 %v1805, 1.442695
    %v1864 = vpow.pop %v1863
    %v1865 = vmul.f32 %v1806, 1.442695
    %v1866 = vpow.pop %v1865
    %v1867 = vmul.f32 %v1807, 1.442695
    %v1868 = vpow.pop %v1867
    %v1869 = vmul.f32 %v1808, 1.442695
    %v1870 = vpow.pop %v1869
    %v1871 = vmul.f32 %v1809, 1.442695
    %v1872 = vpow.pop %v1871
    %v1873 = vmul.f32 %v1810, 1.442695
    %v1874 = vpow.pop %v1873
    %v1875 = vsel %vm1159, %v1812, 0.0
    %1876 = vadd.xlane.f32.xlu0 %v1875
    %v1877 = vpop.xlane.xlu0 %1876
    %v1878 = vsel %vm1159, %v1814, 0.0
    %1879 = vadd.xlane.f32.xlu0 %v1878
    %v1880 = vpop.xlane.xlu0 %1879
    %v1881 = vsel %vm1159, %v1816, 0.0
    %1882 = vadd.xlane.f32.xlu0 %v1881
    %v1883 = vpop.xlane.xlu0 %1882
    %v1884 = vsel %vm1159, %v1818, 0.0
    %1885 = vadd.xlane.f32.xlu0 %v1884
    %v1886 = vpop.xlane.xlu0 %1885
    %v1887 = vsel %vm1159, %v1820, 0.0
    %1888 = vadd.xlane.f32.xlu0 %v1887
    %v1889 = vpop.xlane.xlu0 %1888
    %v1890 = vsel %vm1159, %v1822, 0.0
    %1891 = vadd.xlane.f32.xlu0 %v1890
    %v1892 = vpop.xlane.xlu0 %1891
    %v1893 = vsel %vm1159, %v1824, 0.0
    %1894 = vadd.xlane.f32.xlu0 %v1893
    %v1895 = vpop.xlane.xlu0 %1894
    %v1896 = vsel %vm1159, %v1826, 0.0
    %1897 = vadd.xlane.f32.xlu0 %v1896
    %v1898 = vpop.xlane.xlu0 %1897
    %v1899 = vsel %vm1159, %v1828, 0.0
    %1900 = vadd.xlane.f32.xlu0 %v1899
    %v1901 = vpop.xlane.xlu0 %1900
    %v1902 = vsel %vm1159, %v1830, 0.0
    %1903 = vadd.xlane.f32.xlu0 %v1902
    %v1904 = vpop.xlane.xlu0 %1903
    %v1905 = vsel %vm1159, %v1832, 0.0
    %1906 = vadd.xlane.f32.xlu0 %v1905
    %v1907 = vpop.xlane.xlu0 %1906
    %v1908 = vsel %vm1159, %v1834, 0.0
    %1909 = vadd.xlane.f32.xlu0 %v1908
    %v1910 = vpop.xlane.xlu0 %1909
    %v1911 = vsel %vm1159, %v1836, 0.0
    %1912 = vadd.xlane.f32.xlu0 %v1911
    %v1913 = vpop.xlane.xlu0 %1912
    %v1914 = vsel %vm1159, %v1838, 0.0
    %1915 = vadd.xlane.f32.xlu0 %v1914
    %v1916 = vpop.xlane.xlu0 %1915
    %v1917 = vsel %vm1159, %v1840, 0.0
    %1918 = vadd.xlane.f32.xlu0 %v1917
    %v1919 = vpop.xlane.xlu0 %1918
    %v1920 = vsel %vm1159, %v1842, 0.0
    %1921 = vadd.xlane.f32.xlu0 %v1920
    %v1922 = vpop.xlane.xlu0 %1921
    %v1923 = vsel %vm1159, %v1844, 0.0
    %1924 = vadd.xlane.f32.xlu0 %v1923
    %v1925 = vpop.xlane.xlu0 %1924
    %v1926 = vsel %vm1159, %v1846, 0.0
    %1927 = vadd.xlane.f32.xlu0 %v1926
    %v1928 = vpop.xlane.xlu0 %1927
    %v1929 = vsel %vm1159, %v1848, 0.0
    %1930 = vadd.xlane.f32.xlu0 %v1929
    %v1931 = vpop.xlane.xlu0 %1930
    %v1932 = vsel %vm1159, %v1850, 0.0
    %1933 = vadd.xlane.f32.xlu0 %v1932
    %v1934 = vpop.xlane.xlu0 %1933
    %v1935 = vsel %vm1159, %v1852, 0.0
    %1936 = vadd.xlane.f32.xlu0 %v1935
    %v1937 = vpop.xlane.xlu0 %1936
    %v1938 = vsel %vm1159, %v1854, 0.0
    %1939 = vadd.xlane.f32.xlu0 %v1938
    %v1940 = vpop.xlane.xlu0 %1939
    %v1941 = vsel %vm1159, %v1856, 0.0
    %1942 = vadd.xlane.f32.xlu0 %v1941
    %v1943 = vpop.xlane.xlu0 %1942
    %v1944 = vsel %vm1159, %v1858, 0.0
    %1945 = vadd.xlane.f32.xlu0 %v1944
    %v1946 = vpop.xlane.xlu0 %1945
    %v1947 = vsel %vm1159, %v1860, 0.0
    %1948 = vadd.xlane.f32.xlu0 %v1947
    %v1949 = vpop.xlane.xlu0 %1948
    %v1950 = vsel %vm1159, %v1862, 0.0
    %1951 = vadd.xlane.f32.xlu0 %v1950
    %v1952 = vpop.xlane.xlu0 %1951
    %v1953 = vsel %vm1159, %v1864, 0.0
    %1954 = vadd.xlane.f32.xlu0 %v1953
    %v1955 = vpop.xlane.xlu0 %1954
    %v1956 = vsel %vm1159, %v1866, 0.0
    %1957 = vadd.xlane.f32.xlu0 %v1956
    %v1958 = vpop.xlane.xlu0 %1957
    %v1959 = vsel %vm1159, %v1868, 0.0
    %1960 = vadd.xlane.f32.xlu0 %v1959
    %v1961 = vpop.xlane.xlu0 %1960
    %v1962 = vsel %vm1159, %v1870, 0.0
    %1963 = vadd.xlane.f32.xlu0 %v1962
    %v1964 = vpop.xlane.xlu0 %1963
    %v1965 = vsel %vm1159, %v1872, 0.0
    %1966 = vadd.xlane.f32.xlu0 %v1965
    %v1967 = vpop.xlane.xlu0 %1966
    %v1968 = vsel %vm1159, %v1874, 0.0
    %1969 = vadd.xlane.f32.xlu0 %v1968
    %v1970 = vpop.xlane.xlu0 %1969
    %v1971 = vrcp.pop %v1877
    %v1972 = vrcp.pop %v1880
    %v1973 = vrcp.pop %v1883
    %v1974 = vrcp.pop %v1886
    %v1975 = vrcp.pop %v1889
    %v1976 = vrcp.pop %v1892
    %v1977 = vrcp.pop %v1895
    %v1978 = vrcp.pop %v1898
    %v1979 = vrcp.pop %v1901
    %v1980 = vrcp.pop %v1904
    %v1981 = vrcp.pop %v1907
    %v1982 = vrcp.pop %v1910
    %v1983 = vrcp.pop %v1913
    %v1984 = vrcp.pop %v1916
    %v1985 = vrcp.pop %v1919
    %v1986 = vrcp.pop %v1922
    %v1987 = vrcp.pop %v1925
    %v1988 = vrcp.pop %v1928
    %v1989 = vrcp.pop %v1931
    %v1990 = vrcp.pop %v1934
    %v1991 = vrcp.pop %v1937
    %v1992 = vrcp.pop %v1940
    %v1993 = vrcp.pop %v1943
    %v1994 = vrcp.pop %v1946
    %v1995 = vrcp.pop %v1949
    %v1996 = vrcp.pop %v1952
    %v1997 = vrcp.pop %v1955
    %v1998 = vrcp.pop %v1958
    %v1999 = vrcp.pop %v1961
    %v2000 = vrcp.pop %v1964
    %v2001 = vrcp.pop %v1967
    %v2002 = vrcp.pop %v1970
    %v2003 = vmul.f32 %v1812, %v1971
    %v2004 = vmul.f32 %v1814, %v1972
    %v2005 = vmul.f32 %v1816, %v1973
    %v2006 = vmul.f32 %v1818, %v1974
    %v2007 = vmul.f32 %v1820, %v1975
    %v2008 = vmul.f32 %v1822, %v1976
    %v2009 = vmul.f32 %v1824, %v1977
    %v2010 = vmul.f32 %v1826, %v1978
    %v2011 = vmul.f32 %v1828, %v1979
    %v2012 = vmul.f32 %v1830, %v1980
    %v2013 = vmul.f32 %v1832, %v1981
    %v2014 = vmul.f32 %v1834, %v1982
    %v2015 = vmul.f32 %v1836, %v1983
    %v2016 = vmul.f32 %v1838, %v1984
    %v2017 = vmul.f32 %v1840, %v1985
    %v2018 = vmul.f32 %v1842, %v1986
    %v2019 = vmul.f32 %v1844, %v1987
    %v2020 = vmul.f32 %v1846, %v1988
    %v2021 = vmul.f32 %v1848, %v1989
    %v2022 = vmul.f32 %v1850, %v1990
    %v2023 = vmul.f32 %v1852, %v1991
    %v2024 = vmul.f32 %v1854, %v1992
    %v2025 = vmul.f32 %v1856, %v1993
    %v2026 = vmul.f32 %v1858, %v1994
    %v2027 = vmul.f32 %v1860, %v1995
    %v2028 = vmul.f32 %v1862, %v1996
    %v2029 = vmul.f32 %v1864, %v1997
    %v2030 = vmul.f32 %v1866, %v1998
    %v2031 = vmul.f32 %v1868, %v1999
    %v2032 = vmul.f32 %v1870, %v2000
    %v2033 = vmul.f32 %v1872, %v2001
    %v2034 = vmul.f32 %v1874, %v2002
    %v2035 = vpack.c.bf16 %v2003, %v2003
    %v2036 = vpack.c.bf16 %v2004, %v2004
    %v2037 = vpack.c.bf16 %v2005, %v2005
    %v2038 = vpack.c.bf16 %v2006, %v2006
    %v2039 = vpack.c.bf16 %v2007, %v2007
    %v2040 = vpack.c.bf16 %v2008, %v2008
    %v2041 = vpack.c.bf16 %v2009, %v2009
    %v2042 = vpack.c.bf16 %v2010, %v2010
    %v2043 = vpack.c.bf16 %v2011, %v2011
    %v2044 = vpack.c.bf16 %v2012, %v2012
    %v2045 = vpack.c.bf16 %v2013, %v2013
    %v2046 = vpack.c.bf16 %v2014, %v2014
    %v2047 = vpack.c.bf16 %v2015, %v2015
    %v2048 = vpack.c.bf16 %v2016, %v2016
    %v2049 = vpack.c.bf16 %v2017, %v2017
    %v2050 = vpack.c.bf16 %v2018, %v2018
    %v2051 = vpack.c.bf16 %v2019, %v2019
    %v2052 = vpack.c.bf16 %v2020, %v2020
    %v2053 = vpack.c.bf16 %v2021, %v2021
    %v2054 = vpack.c.bf16 %v2022, %v2022
    %v2055 = vpack.c.bf16 %v2023, %v2023
    %v2056 = vpack.c.bf16 %v2024, %v2024
    %v2057 = vpack.c.bf16 %v2025, %v2025
    %v2058 = vpack.c.bf16 %v2026, %v2026
    %v2059 = vpack.c.bf16 %v2027, %v2027
    %v2060 = vpack.c.bf16 %v2028, %v2028
    %v2061 = vpack.c.bf16 %v2029, %v2029
    %v2062 = vpack.c.bf16 %v2030, %v2030
    %v2063 = vpack.c.bf16 %v2031, %v2031
    %v2064 = vpack.c.bf16 %v2032, %v2032
    %v2065 = vpack.c.bf16 %v2033, %v2033
    %v2066 = vpack.c.bf16 %v2034, %v2034
    %v2075 = vunpack.c.l.b16 %v2035
    %v2076 = vunpack.c.l.b16 %v2036
    %v2077 = vunpack.c.l.b16 %v2037
    %v2078 = vunpack.c.l.b16 %v2038
    %v2079 = vunpack.c.l.b16 %v2039
    %v2080 = vunpack.c.l.b16 %v2040
    %v2081 = vunpack.c.l.b16 %v2041
    %v2082 = vunpack.c.l.b16 %v2042
    %v2083 = vpack.c.b16 %v2076, %v2075
    %v2084 = vpack.c.b16 %v2078, %v2077
    %v2085 = vpack.c.b16 %v2080, %v2079
    %v2086 = vpack.c.b16 %v2082, %v2081
    %v2095 = vunpack.c.l.b16 %v1319
    %v2096 = vunpack.c.l.b16 %v1320
    %v2097 = vunpack.c.l.b16 %v1321
    %v2098 = vunpack.c.l.b16 %v1322
    %v2099 = vunpack.c.l.b16 %v1323
    %v2100 = vunpack.c.l.b16 %v1324
    %v2101 = vunpack.c.l.b16 %v1325
    %v2102 = vunpack.c.l.b16 %v1326
    %v2103 = vpack.c.b16 %v2096, %v2095
    %v2104 = vpack.c.b16 %v2098, %v2097
    %v2105 = vpack.c.b16 %v2100, %v2099
    %v2106 = vpack.c.b16 %v2102, %v2101
    %v2112 = vsel %vm1159, %v2083, 0
    %v2115 = vsel %vm1159, %v2084, 0
    %v2118 = vsel %vm1159, %v2085, 0
    %v2121 = vsel %vm1159, %v2086, 0
    %2123 = vmatpush.bf16.msra.mxu0 0
    %2124 = vmatpush.bf16.msra.mxu0 0
    %2125 = vmatpush.bf16.msra.mxu0 0
    %2126 = vmatpush.bf16.msra.mxu0 0
    %2127 = vmatpush.bf16.msra.mxu0 %v2106
    %2128 = vmatpush.bf16.msra.mxu0 %v2105
    %2129 = vmatpush.bf16.msra.mxu0 %v2104
    %2130 = vmatpush.bf16.msra.mxu0 %v2103
    %2131 = vmatmul.bf16.gmra.mxu0 %v2112
    %v2132 = vpop.f32.mrf.mxu0
    %v2133 = vadd.f32 0.0, %v2132
    %v2134 = vpop.f32.mrf.mxu0
    %v2135 = vadd.f32 0.0, %v2134
    %2136 = vmatmul.bf16.gmra.mxu0 %v2115
    %v2137 = vpop.f32.mrf.mxu0
    %v2138 = vadd.f32 0.0, %v2137
    %v2139 = vpop.f32.mrf.mxu0
    %v2140 = vadd.f32 0.0, %v2139
    %2141 = vmatmul.bf16.gmra.mxu0 %v2118
    %v2142 = vpop.f32.mrf.mxu0
    %v2143 = vadd.f32 0.0, %v2142
    %v2144 = vpop.f32.mrf.mxu0
    %v2145 = vadd.f32 0.0, %v2144
    %2146 = vmatmul.bf16.gmra.mxu0 %v2121
    %v2147 = vpop.f32.mrf.mxu0
    %v2148 = vadd.f32 0.0, %v2147
    %v2149 = vpop.f32.mrf.mxu0
    %v2150 = vadd.f32 0.0, %v2149
    %2151 = vdwg.mxu0
    %v2160 = vunpack.c.l.b16 %v2043
    %v2161 = vunpack.c.l.b16 %v2044
    %v2162 = vunpack.c.l.b16 %v2045
    %v2163 = vunpack.c.l.b16 %v2046
    %v2164 = vunpack.c.l.b16 %v2047
    %v2165 = vunpack.c.l.b16 %v2048
    %v2166 = vunpack.c.l.b16 %v2049
    %v2167 = vunpack.c.l.b16 %v2050
    %v2168 = vpack.c.b16 %v2161, %v2160
    %v2169 = vpack.c.b16 %v2163, %v2162
    %v2170 = vpack.c.b16 %v2165, %v2164
    %v2171 = vpack.c.b16 %v2167, %v2166
    %v2180 = vunpack.c.l.b16 %v1327
    %v2181 = vunpack.c.l.b16 %v1328
    %v2182 = vunpack.c.l.b16 %v1329
    %v2183 = vunpack.c.l.b16 %v1330
    %v2184 = vunpack.c.l.b16 %v1331
    %v2185 = vunpack.c.l.b16 %v1332
    %v2186 = vunpack.c.l.b16 %v1333
    %v2187 = vunpack.c.l.b16 %v1334
    %v2188 = vpack.c.b16 %v2181, %v2180
    %v2189 = vpack.c.b16 %v2183, %v2182
    %v2190 = vpack.c.b16 %v2185, %v2184
    %v2191 = vpack.c.b16 %v2187, %v2186
    %v2197 = vsel %vm1159, %v2168, 0
    %v2200 = vsel %vm1159, %v2169, 0
    %v2203 = vsel %vm1159, %v2170, 0
    %v2206 = vsel %vm1159, %v2171, 0
    %2208 = vmatpush.bf16.msra.mxu0 0
    %2209 = vmatpush.bf16.msra.mxu0 0
    %2210 = vmatpush.bf16.msra.mxu0 0
    %2211 = vmatpush.bf16.msra.mxu0 0
    %2212 = vmatpush.bf16.msra.mxu0 %v2191
    %2213 = vmatpush.bf16.msra.mxu0 %v2190
    %2214 = vmatpush.bf16.msra.mxu0 %v2189
    %2215 = vmatpush.bf16.msra.mxu0 %v2188
    %2216 = vmatmul.bf16.gmra.mxu0 %v2197
    %v2217 = vpop.f32.mrf.mxu0
    %v2218 = vadd.f32 0.0, %v2217
    %v2219 = vpop.f32.mrf.mxu0
    %v2220 = vadd.f32 0.0, %v2219
    %2221 = vmatmul.bf16.gmra.mxu0 %v2200
    %v2222 = vpop.f32.mrf.mxu0
    %v2223 = vadd.f32 0.0, %v2222
    %v2224 = vpop.f32.mrf.mxu0
    %v2225 = vadd.f32 0.0, %v2224
    %2226 = vmatmul.bf16.gmra.mxu0 %v2203
    %v2227 = vpop.f32.mrf.mxu0
    %v2228 = vadd.f32 0.0, %v2227
    %v2229 = vpop.f32.mrf.mxu0
    %v2230 = vadd.f32 0.0, %v2229
    %2231 = vmatmul.bf16.gmra.mxu0 %v2206
    %v2232 = vpop.f32.mrf.mxu0
    %v2233 = vadd.f32 0.0, %v2232
    %v2234 = vpop.f32.mrf.mxu0
    %v2235 = vadd.f32 0.0, %v2234
    %2236 = vdwg.mxu0
    %v2245 = vunpack.c.l.b16 %v2051
    %v2246 = vunpack.c.l.b16 %v2052
    %v2247 = vunpack.c.l.b16 %v2053
    %v2248 = vunpack.c.l.b16 %v2054
    %v2249 = vunpack.c.l.b16 %v2055
    %v2250 = vunpack.c.l.b16 %v2056
    %v2251 = vunpack.c.l.b16 %v2057
    %v2252 = vunpack.c.l.b16 %v2058
    %v2253 = vpack.c.b16 %v2246, %v2245
    %v2254 = vpack.c.b16 %v2248, %v2247
    %v2255 = vpack.c.b16 %v2250, %v2249
    %v2256 = vpack.c.b16 %v2252, %v2251
    %v2265 = vunpack.c.l.b16 %v1335
    %v2266 = vunpack.c.l.b16 %v1336
    %v2267 = vunpack.c.l.b16 %v1337
    %v2268 = vunpack.c.l.b16 %v1338
    %v2269 = vunpack.c.l.b16 %v1339
    %v2270 = vunpack.c.l.b16 %v1340
    %v2271 = vunpack.c.l.b16 %v1341
    %v2272 = vunpack.c.l.b16 %v1342
    %v2273 = vpack.c.b16 %v2266, %v2265
    %v2274 = vpack.c.b16 %v2268, %v2267
    %v2275 = vpack.c.b16 %v2270, %v2269
    %v2276 = vpack.c.b16 %v2272, %v2271
    %v2282 = vsel %vm1159, %v2253, 0
    %v2285 = vsel %vm1159, %v2254, 0
    %v2288 = vsel %vm1159, %v2255, 0
    %v2291 = vsel %vm1159, %v2256, 0
    %2293 = vmatpush.bf16.msra.mxu0 0
    %2294 = vmatpush.bf16.msra.mxu0 0
    %2295 = vmatpush.bf16.msra.mxu0 0
    %2296 = vmatpush.bf16.msra.mxu0 0
    %2297 = vmatpush.bf16.msra.mxu0 %v2276
    %2298 = vmatpush.bf16.msra.mxu0 %v2275
    %2299 = vmatpush.bf16.msra.mxu0 %v2274
    %2300 = vmatpush.bf16.msra.mxu0 %v2273
    %2301 = vmatmul.bf16.gmra.mxu0 %v2282
    %v2302 = vpop.f32.mrf.mxu0
    %v2303 = vadd.f32 0.0, %v2302
    %v2304 = vpop.f32.mrf.mxu0
    %v2305 = vadd.f32 0.0, %v2304
    %2306 = vmatmul.bf16.gmra.mxu0 %v2285
    %v2307 = vpop.f32.mrf.mxu0
    %v2308 = vadd.f32 0.0, %v2307
    %v2309 = vpop.f32.mrf.mxu0
    %v2310 = vadd.f32 0.0, %v2309
    %2311 = vmatmul.bf16.gmra.mxu0 %v2288
    %v2312 = vpop.f32.mrf.mxu0
    %v2313 = vadd.f32 0.0, %v2312
    %v2314 = vpop.f32.mrf.mxu0
    %v2315 = vadd.f32 0.0, %v2314
    %2316 = vmatmul.bf16.gmra.mxu0 %v2291
    %v2317 = vpop.f32.mrf.mxu0
    %v2318 = vadd.f32 0.0, %v2317
    %v2319 = vpop.f32.mrf.mxu0
    %v2320 = vadd.f32 0.0, %v2319
    %2321 = vdwg.mxu0
    %v2330 = vunpack.c.l.b16 %v2059
    %v2331 = vunpack.c.l.b16 %v2060
    %v2332 = vunpack.c.l.b16 %v2061
    %v2333 = vunpack.c.l.b16 %v2062
    %v2334 = vunpack.c.l.b16 %v2063
    %v2335 = vunpack.c.l.b16 %v2064
    %v2336 = vunpack.c.l.b16 %v2065
    %v2337 = vunpack.c.l.b16 %v2066
    %v2338 = vpack.c.b16 %v2331, %v2330
    %v2339 = vpack.c.b16 %v2333, %v2332
    %v2340 = vpack.c.b16 %v2335, %v2334
    %v2341 = vpack.c.b16 %v2337, %v2336
    %v2350 = vunpack.c.l.b16 %v1343
    %v2351 = vunpack.c.l.b16 %v1344
    %v2352 = vunpack.c.l.b16 %v1345
    %v2353 = vunpack.c.l.b16 %v1346
    %v2354 = vunpack.c.l.b16 %v1347
    %v2355 = vunpack.c.l.b16 %v1348
    %v2356 = vunpack.c.l.b16 %v1349
    %v2357 = vunpack.c.l.b16 %v1350
    %v2358 = vpack.c.b16 %v2351, %v2350
    %v2359 = vpack.c.b16 %v2353, %v2352
    %v2360 = vpack.c.b16 %v2355, %v2354
    %v2361 = vpack.c.b16 %v2357, %v2356
    %v2367 = vsel %vm1159, %v2338, 0
    %v2370 = vsel %vm1159, %v2339, 0
    %v2373 = vsel %vm1159, %v2340, 0
    %v2376 = vsel %vm1159, %v2341, 0
    %2378 = vmatpush.bf16.msra.mxu0 0
    %2379 = vmatpush.bf16.msra.mxu0 0
    %2380 = vmatpush.bf16.msra.mxu0 0
    %2381 = vmatpush.bf16.msra.mxu0 0
    %2382 = vmatpush.bf16.msra.mxu0 %v2361
    %2383 = vmatpush.bf16.msra.mxu0 %v2360
    %2384 = vmatpush.bf16.msra.mxu0 %v2359
    %2385 = vmatpush.bf16.msra.mxu0 %v2358
    %2386 = vmatmul.bf16.gmra.mxu0 %v2367
    %v2387 = vpop.f32.mrf.mxu0
    %v2388 = vadd.f32 0.0, %v2387
    %v2389 = vpop.f32.mrf.mxu0
    %v2390 = vadd.f32 0.0, %v2389
    %2391 = vmatmul.bf16.gmra.mxu0 %v2370
    %v2392 = vpop.f32.mrf.mxu0
    %v2393 = vadd.f32 0.0, %v2392
    %v2394 = vpop.f32.mrf.mxu0
    %v2395 = vadd.f32 0.0, %v2394
    %2396 = vmatmul.bf16.gmra.mxu0 %v2373
    %v2397 = vpop.f32.mrf.mxu0
    %v2398 = vadd.f32 0.0, %v2397
    %v2399 = vpop.f32.mrf.mxu0
    %v2400 = vadd.f32 0.0, %v2399
    %2401 = vmatmul.bf16.gmra.mxu0 %v2376
    %v2402 = vpop.f32.mrf.mxu0
    %v2403 = vadd.f32 0.0, %v2402
    %v2404 = vpop.f32.mrf.mxu0
    %v2405 = vadd.f32 0.0, %v2404
    %2406 = vdwg.mxu0
    %2407 = vst.msk [vmem:[#allocation3] sm:$0xff] %vm1159, %v2133
    %2408 = vst.msk [vmem:[#allocation3 + $0x8] sm:$0xff] %vm1159, %v2135
    %2409 = vst.msk [vmem:[#allocation3 + $0x10] sm:$0xff] %vm1159, %v2138
    %2410 = vst.msk [vmem:[#allocation3 + $0x18] sm:$0xff] %vm1159, %v2140
    %2411 = vst.msk [vmem:[#allocation3 + $0x20] sm:$0xff] %vm1159, %v2143
    %2412 = vst.msk [vmem:[#allocation3 + $0x28] sm:$0xff] %vm1159, %v2145
    %2413 = vst.msk [vmem:[#allocation3 + $0x30] sm:$0xff] %vm1159, %v2148
    %2414 = vst.msk [vmem:[#allocation3 + $0x38] sm:$0xff] %vm1159, %v2150
    %2415 = vst.msk [vmem:[#allocation3 + $0x40] sm:$0xff] %vm1159, %v2218
    %2416 = vst.msk [vmem:[#allocation3 + $0x48] sm:$0xff] %vm1159, %v2220
    %2417 = vst.msk [vmem:[#allocation3 + $0x50] sm:$0xff] %vm1159, %v2223
    %2418 = vst.msk [vmem:[#allocation3 + $0x58] sm:$0xff] %vm1159, %v2225
    %2419 = vst.msk [vmem:[#allocation3 + $0x60] sm:$0xff] %vm1159, %v2228
    %2420 = vst.msk [vmem:[#allocation3 + $0x68] sm:$0xff] %vm1159, %v2230
    %2421 = vst.msk [vmem:[#allocation3 + $0x70] sm:$0xff] %vm1159, %v2233
    %2422 = vst.msk [vmem:[#allocation3 + $0x78] sm:$0xff] %vm1159, %v2235
    %2423 = vst.msk [vmem:[#allocation3 + $0x80] sm:$0xff] %vm1159, %v2303
    %2424 = vst.msk [vmem:[#allocation3 + $0x88] sm:$0xff] %vm1159, %v2305
    %2425 = vst.msk [vmem:[#allocation3 + $0x90] sm:$0xff] %vm1159, %v2308
    %2426 = vst.msk [vmem:[#allocation3 + $0x98] sm:$0xff] %vm1159, %v2310
    %2427 = vst.msk [vmem:[#allocation3 + $0xa0] sm:$0xff] %vm1159, %v2313
    %2428 = vst.msk [vmem:[#allocation3 + $0xa8] sm:$0xff] %vm1159, %v2315
    %2429 = vst.msk [vmem:[#allocation3 + $0xb0] sm:$0xff] %vm1159, %v2318
    %2430 = vst.msk [vmem:[#allocation3 + $0xb8] sm:$0xff] %vm1159, %v2320
    %2431 = vst.msk [vmem:[#allocation3 + $0xc0] sm:$0xff] %vm1159, %v2388
    %2432 = vst.msk [vmem:[#allocation3 + $0xc8] sm:$0xff] %vm1159, %v2390
    %2433 = vst.msk [vmem:[#allocation3 + $0xd0] sm:$0xff] %vm1159, %v2393
    %2434 = vst.msk [vmem:[#allocation3 + $0xd8] sm:$0xff] %vm1159, %v2395
    %2435 = vst.msk [vmem:[#allocation3 + $0xe0] sm:$0xff] %vm1159, %v2398
    %2436 = vst.msk [vmem:[#allocation3 + $0xe8] sm:$0xff] %vm1159, %v2400
    %2437 = vst.msk [vmem:[#allocation3 + $0xf0] sm:$0xff] %vm1159, %v2403
    %2438 = vst.msk [vmem:[#allocation3 + $0xf8] sm:$0xff] %vm1159, %v2405
    // Predicated region
    $region14: #{tpu_custom_call.1} parent=1 // pred_check
      _
    $region15: #{tpu_custom_call.1} parent=1 // pred_check_branch
      %2440 = sbr.rel (0) target = $region17
    $region16: #{tpu_custom_call.1} parent=1 // pred_region
      %2442 = vsyncadd [#allocation4], 0
      %s2443 = sshll.u32 [#allocation3], 4
      %s2444 = int_to_ptr.vmem [resolvable:$true] %s2443
      %s2445 = sshll.u32 %s3, 4
      %s2446 = int_to_ptr.hbm [resolvable:$true] %s2445
      %2451 = dma.vmem_to_hbm [thread:$0]  %s2444, 4096, %s2446, [#allocation4], 128, 128, 8
    $region17: #{tpu_custom_call.1} parent=1 // pred_fallthru
      _
    // Predicated region
    $region18: #{tpu_custom_call.1} parent=1 // pred_check
      _
    $region19: #{tpu_custom_call.1} parent=1 // pred_check_branch
      %2453 = sbr.rel (0) target = $region21
    $region20: #{tpu_custom_call.1} parent=1 // pred_region
      %2455 = dma.done [#allocation4], 4096
    $region21: #{tpu_custom_call.1} parent=1 // pred_fallthru
      _
    %2456 = vsyncpa [#allocation4], 1

</llo_original>
